<compile_context>
chip_gen: v7x
topology: tpu7x:2x2x1
jax: 0.10.0
libtpu: 0.0.40
codegen_flags: <defaults>
</compile_context>

<pallas_src>
import jax
import jax.numpy as jnp
from jax.experimental import pallas as pl
from jax.experimental.pallas import tpu as pltpu


def _round_up(n, m):
    return ((n + m - 1) // m) * m


def _gru_kernel(x_ref, h0_ref, wih_ref, whh_ref, brz_ref, bn_ref,
                out_ref, gi_ref):
    """Shapes (all padded):
       x_ref   (T*Bp, Ep)    flattened embedded inputs, all timesteps
       h0_ref  (Bp, Hp)      initial hidden state
       wih_ref (Ep, 3*Hp)    W_ih^T, gate-blocked [r | z | n] at Hp boundaries
       whh_ref (Hp, 3*Hp)    W_hh^T, gate-blocked [r | z | n] at Hp boundaries
       brz_ref (1, 3*Hp)     fused bias: b_ih (all gates) + b_hh for r,z gates
       bn_ref  (1, Hp)       b_hh_n (must stay inside the loop: gated by r)
       out_ref (T*Bp, Hp)    hidden state for every timestep
       gi_ref  (T*Bp, 3*Hp)  VMEM scratch for the precomputed input projection."""
    Bp, Hp = h0_ref.shape
    T = x_ref.shape[0] // Bp

    # ---- phase 1: one dense input projection for ALL timesteps (big MXU matmul)
    gi_ref[...] = (
        jnp.dot(x_ref[...], wih_ref[...], preferred_element_type=jnp.float32)
        + brz_ref[...])

    bn = bn_ref[...]                                   # (1, Hp)

    # ---- phase 2: sequential recurrence; only h @ Whh^T per step --------------
    def step(t, h):
        row = t * Bp
        gi = gi_ref[pl.ds(row, Bp), :]                                 # (Bp, 3Hp)
        gh = jnp.dot(h, whh_ref[...],
                     preferred_element_type=jnp.float32)               # (Bp, 3Hp)
        r = jax.nn.sigmoid(gi[:, :Hp] + gh[:, :Hp])
        z = jax.nn.sigmoid(gi[:, Hp:2 * Hp] + gh[:, Hp:2 * Hp])
        n = jnp.tanh(gi[:, 2 * Hp:] + r * (gh[:, 2 * Hp:] + bn))
        h_new = (1.0 - z) * n + z * h
        out_ref[pl.ds(row, Bp), :] = h_new.astype(out_ref.dtype)
        return h_new

    if T <= 32:
        # Fully unrolled: constant indices, whole schedule visible to the LLO.
        h = h0_ref[...]
        for t in range(T):
            h = step(t, h)
    else:
        # Larger sequences: rolled loop with dynamic (sublane-aligned) slices.
        jax.lax.fori_loop(0, T, step, h0_ref[...])


def gru_forward(x_emb, h0, w_ih, w_hh, b_ih, b_hh):
    """x_emb: (T, B, E), h0: (1, B, H). PyTorch weight layout:
       w_ih (3H, E), w_hh (3H, H), b_ih/b_hh (3H,). Gate order [r | z | n]."""
    T, B, E = x_emb.shape
    H = h0.shape[-1]
    Bp = _round_up(max(B, 8), 8)       # sublane-dense batch
    Ep = _round_up(E, 128)             # lane-dense input width
    Hp = _round_up(H, 128)             # lane-dense hidden width

    f32 = jnp.float32

    def pad2(a, rows, cols):
        return jnp.zeros((rows, cols), f32).at[:a.shape[0], :a.shape[1]].set(
            a.astype(f32))

    def pad1(v, n):
        return jnp.zeros((n,), f32).at[:v.shape[0]].set(v.astype(f32))

    # Per-gate transpose + pad so every gate starts on an Hp (=128-lane) boundary.
    wih_t = jnp.concatenate(
        [pad2(w_ih[g * H:(g + 1) * H].T, Ep, Hp) for g in range(3)], axis=1)  # (Ep, 3Hp)
    whh_t = jnp.concatenate(
        [pad2(w_hh[g * H:(g + 1) * H].T, Hp, Hp) for g in range(3)], axis=1)  # (Hp, 3Hp)
    # TODO(synk): for production-size H on v6e/v7x, cast wih_t/whh_t to bfloat16
    # (keep f32 accumulation) and set vmem_limit_bytes explicitly.

    # Fused bias: b_ih (all gates) + b_hh for r,z; b_hh_n stays separate (gated by r).
    brz = jnp.concatenate([pad1(b_ih[:H] + b_hh[:H], Hp),
                           pad1(b_ih[H:2 * H] + b_hh[H:2 * H], Hp),
                           pad1(b_ih[2 * H:], Hp)]).reshape(1, 3 * Hp)
    bn = pad1(b_hh[2 * H:], Hp).reshape(1, Hp)

    # Pad activations to the native (8, 128) tile and flatten time into sublanes.
    x_pad = jnp.zeros((T, Bp, Ep), f32).at[:, :B, :E].set(x_emb.astype(f32))
    x_flat = x_pad.reshape(T * Bp, Ep)
    h0_pad = jnp.zeros((Bp, Hp), f32).at[:B, :H].set(h0[0].astype(f32))

    out_flat = pl.pallas_call(
        _gru_kernel,
        out_shape=jax.ShapeDtypeStruct((T * Bp, Hp), f32),
        grid_spec=pltpu.PrefetchScalarGridSpec(
            num_scalar_prefetch=0,
            grid=(1,),                                        # whole GRU in one step
            in_specs=[
                pl.BlockSpec((T * Bp, Ep), lambda i: (0, 0)),     # x, all timesteps
                pl.BlockSpec((Bp, Hp), lambda i: (0, 0)),         # h0
                pl.BlockSpec((Ep, 3 * Hp), lambda i: (0, 0)),     # W_ih^T (gate-padded)
                pl.BlockSpec((Hp, 3 * Hp), lambda i: (0, 0)),     # W_hh^T (gate-padded)
                pl.BlockSpec((1, 3 * Hp), lambda i: (0, 0)),      # fused bias
                pl.BlockSpec((1, Hp), lambda i: (0, 0)),          # b_hh_n
            ],
            out_specs=pl.BlockSpec((T * Bp, Hp), lambda i: (0, 0)),
            scratch_shapes=[pltpu.VMEM((T * Bp, 3 * Hp), f32)],   # precomputed gi
        ),
        compiler_params=pltpu.CompilerParams(
            dimension_semantics=("arbitrary",)),   # recurrence lives inside the kernel
    )(x_flat, h0_pad, wih_t, whh_t, brz, bn)

    out = out_flat.reshape(T, Bp, Hp)[:, :B, :H]       # drop padding
    hT = out[T - 1:T]                                  # (1, B, H) — final hidden
    return out, hT


def encoder_rnn_forward(token_ids, h0, embedding_table, w_ih, w_hh, b_ih, b_hh,
                        need_embedding=True):
    """Mirrors EncoderRNN.forward: embed (optional) then run the GRU."""
    if need_embedding:
        x = jnp.take(embedding_table, token_ids.astype(jnp.int32), axis=0)  # (T, B, E)
    else:
        x = token_ids
    return gru_forward(x, h0, w_ih, w_hh, b_ih, b_hh)


def _gru_reference(x_emb, h0, w_ih, w_hh, b_ih, b_hh):
    """Pure-JAX reference (lax.scan) implementing PyTorch GRU semantics."""
    H = h0.shape[-1]

    def step(h, x):
        gi = x @ w_ih.T + b_ih
        gh = h @ w_hh.T + b_hh
        i_r, i_z, i_n = gi[:, :H], gi[:, H:2 * H], gi[:, 2 * H:]
        h_r, h_z, h_n = gh[:, :H], gh[:, H:2 * H], gh[:, 2 * H:]
        r = jax.nn.sigmoid(i_r + h_r)
        z = jax.nn.sigmoid(i_z + h_z)
        n = jnp.tanh(i_n + r * h_n)
        h_new = (1.0 - z) * n + z * h
        return h_new, h_new

    hT, outs = jax.lax.scan(step, h0[0], x_emb)
    return outs, hT[None]


if __name__ == "__main__":
    # Small, module-consistent shapes (num_layers=1, bidirectional=False).
    T, B = 8, 2          # seq_len, batch
    V = 20               # vocab size (len(embedding.word2index))
    E = 32               # embedding_dim == GRU input size (hidden_size attr)
    H = 32               # encode_size == GRU hidden size

    key = jax.random.PRNGKey(0)
    k_emb, k_wih, k_whh, k_bih, k_bhh, k_ids = jax.random.split(key, 6)

    embedding_table = jax.random.normal(k_emb, (V, E), dtype=jnp.float32) * 0.1
    w_ih = jax.random.normal(k_wih, (3 * H, E), dtype=jnp.float32) * 0.1
    w_hh = jax.random.normal(k_whh, (3 * H, H), dtype=jnp.float32) * 0.1
    b_ih = jax.random.normal(k_bih, (3 * H,), dtype=jnp.float32) * 0.1
    b_hh = jax.random.normal(k_bhh, (3 * H,), dtype=jnp.float32) * 0.1

    token_ids = jax.random.randint(k_ids, (T, B), 0, V, dtype=jnp.int32)
    h0 = jnp.zeros((1, B, H), dtype=jnp.float32)   # init_hidden(batch_size)

    out, hT = encoder_rnn_forward(token_ids, h0, embedding_table,
                                  w_ih, w_hh, b_ih, b_hh)
    out = jax.block_until_ready(out)
    hT = jax.block_until_ready(hT)

    # Correctness check against a pure-JAX reference.
    x_emb = jnp.take(embedding_table, token_ids, axis=0)
    ref_out, ref_hT = _gru_reference(x_emb, h0, w_ih, w_hh, b_ih, b_hh)
    assert out.shape == (T, B, H) and hT.shape == (1, B, H)
    assert jnp.allclose(out, ref_out, atol=1e-5, rtol=1e-5)
    assert jnp.allclose(hT, ref_hT, atol=1e-5, rtol=1e-5)

    print("KERNEL_OK")
</pallas_src>

<mosaic_0001>
module attributes {stable_mosaic.version = 11 : i64} {
  func.func @_gru_kernel(%arg0: i32, %arg1: memref<64x128xf32, #tpu.memory_space<vmem>>, %arg2: memref<8x128xf32, #tpu.memory_space<vmem>>, %arg3: memref<128x384xf32, #tpu.memory_space<vmem>>, %arg4: memref<128x384xf32, #tpu.memory_space<vmem>>, %arg5: memref<1x384xf32, #tpu.memory_space<vmem>>, %arg6: memref<1x128xf32, #tpu.memory_space<vmem>>, %arg7: memref<64x128xf32, #tpu.memory_space<vmem>>, %arg8: memref<64x384xf32, #tpu.memory_space<vmem>>) attributes {dimension_semantics = [#tpu.dimension_semantics<arbitrary>], iteration_bounds = array<i64: 1>, scalar_prefetch = 0 : i64, scratch_operands = 1 : i64, tpu.core_type = #tpu.core_type<tc>, window_params = [{pipeline_mode = #tpu.pipeline_mode<synchronous>, transform_indices = @transform_0, window_bounds = array<i64: 64, 128>}, {pipeline_mode = #tpu.pipeline_mode<synchronous>, transform_indices = @transform_1, window_bounds = array<i64: 8, 128>}, {pipeline_mode = #tpu.pipeline_mode<synchronous>, transform_indices = @transform_2, window_bounds = array<i64: 128, 384>}, {pipeline_mode = #tpu.pipeline_mode<synchronous>, transform_indices = @transform_3, window_bounds = array<i64: 128, 384>}, {pipeline_mode = #tpu.pipeline_mode<synchronous>, transform_indices = @transform_4, window_bounds = array<i64: 1, 384>}, {pipeline_mode = #tpu.pipeline_mode<synchronous>, transform_indices = @transform_5, window_bounds = array<i64: 1, 128>}, {pipeline_mode = #tpu.pipeline_mode<synchronous>, transform_indices = @transform_6, window_bounds = array<i64: 64, 128>}]} {
    %c0 = arith.constant 0 : index
    %c0_0 = arith.constant 0 : index
    %0 = vector.load %arg1[%c0, %c0_0] : memref<64x128xf32, #tpu.memory_space<vmem>>, vector<64x128xf32>
    %c0_1 = arith.constant 0 : index
    %c0_2 = arith.constant 0 : index
    %1 = vector.load %arg3[%c0_1, %c0_2] : memref<128x384xf32, #tpu.memory_space<vmem>>, vector<128x384xf32>
    %cst = arith.constant dense<0.000000e+00> : vector<64x384xf32>
    %2 = tpu.matmul %0, %1, %cst {dimension_numbers = #tpu.dot_dimension_numbers<[1], [0], [0], [1], [0, 0, 1, 1], [], []>} : vector<64x128xf32>, vector<128x384xf32>, vector<64x384xf32> -> vector<64x384xf32>
    %c0_3 = arith.constant 0 : index
    %c0_4 = arith.constant 0 : index
    %3 = vector.load %arg5[%c0_3, %c0_4] : memref<1x384xf32, #tpu.memory_space<vmem>>, vector<1x384xf32>
    %4 = vector.broadcast %3 : vector<1x384xf32> to vector<64x384xf32>
    %5 = arith.addf %2, %4 : vector<64x384xf32>
    %c0_5 = arith.constant 0 : index
    %c0_6 = arith.constant 0 : index
    %6 = vector.load %arg8[%c0_5, %c0_6] : memref<64x384xf32, #tpu.memory_space<vmem>>, vector<64x384xf32>
    tpu.vector_store %arg8[%c0_5, %c0_6], %5 {strides = array<i32>} : memref<64x384xf32, #tpu.memory_space<vmem>>, vector<64x384xf32>,
    %c0_7 = arith.constant 0 : index
    %c0_8 = arith.constant 0 : index
    %7 = vector.load %arg6[%c0_7, %c0_8] : memref<1x128xf32, #tpu.memory_space<vmem>>, vector<1x128xf32>
    %c0_9 = arith.constant 0 : index
    %c0_10 = arith.constant 0 : index
    %8 = vector.load %arg2[%c0_9, %c0_10] : memref<8x128xf32, #tpu.memory_space<vmem>>, vector<8x128xf32>
    %c0_11 = arith.constant 0 : index
    %c0_12 = arith.constant 0 : index
    %9 = vector.load %arg8[%c0_11, %c0_12] : memref<64x384xf32, #tpu.memory_space<vmem>>, vector<8x384xf32>
    %c0_13 = arith.constant 0 : index
    %c0_14 = arith.constant 0 : index
    %10 = vector.load %arg4[%c0_13, %c0_14] : memref<128x384xf32, #tpu.memory_space<vmem>>, vector<128x384xf32>
    %cst_15 = arith.constant dense<0.000000e+00> : vector<8x384xf32>
    %11 = tpu.matmul %8, %10, %cst_15 {dimension_numbers = #tpu.dot_dimension_numbers<[1], [0], [0], [1], [0, 0, 1, 1], [], []>} : vector<8x128xf32>, vector<128x384xf32>, vector<8x384xf32> -> vector<8x384xf32>
    %12 = vector.extract_strided_slice %9 {offsets = [0, 0], sizes = [8, 128], strides = [1, 1]} : vector<8x384xf32> to vector<8x128xf32>
    %13 = vector.extract_strided_slice %11 {offsets = [0, 0], sizes = [8, 128], strides = [1, 1]} : vector<8x384xf32> to vector<8x128xf32>
    %14 = arith.addf %12, %13 : vector<8x128xf32>
    %15 = arith.negf %14 : vector<8x128xf32>
    %16 = math.exp %15 : vector<8x128xf32>
    %cst_16 = arith.constant 1.000000e+00 : f32
    %17 = vector.broadcast %cst_16 : f32 to vector<8x128xf32>
    %18 = arith.addf %17, %16 : vector<8x128xf32>
    %19 = arith.divf %17, %18 : vector<8x128xf32>
    %20 = vector.extract_strided_slice %9 {offsets = [0, 128], sizes = [8, 128], strides = [1, 1]} : vector<8x384xf32> to vector<8x128xf32>
    %21 = vector.extract_strided_slice %11 {offsets = [0, 128], sizes = [8, 128], strides = [1, 1]} : vector<8x384xf32> to vector<8x128xf32>
    %22 = arith.addf %20, %21 : vector<8x128xf32>
    %23 = arith.negf %22 : vector<8x128xf32>
    %24 = math.exp %23 : vector<8x128xf32>
    %cst_17 = arith.constant 1.000000e+00 : f32
    %25 = vector.broadcast %cst_17 : f32 to vector<8x128xf32>
    %26 = arith.addf %25, %24 : vector<8x128xf32>
    %27 = arith.divf %25, %26 : vector<8x128xf32>
    %28 = vector.extract_strided_slice %9 {offsets = [0, 256], sizes = [8, 128], strides = [1, 1]} : vector<8x384xf32> to vector<8x128xf32>
    %29 = vector.extract_strided_slice %11 {offsets = [0, 256], sizes = [8, 128], strides = [1, 1]} : vector<8x384xf32> to vector<8x128xf32>
    %30 = vector.broadcast %7 : vector<1x128xf32> to vector<8x128xf32>
    %31 = arith.addf %29, %30 : vector<8x128xf32>
    %32 = arith.mulf %19, %31 : vector<8x128xf32>
    %33 = arith.addf %28, %32 : vector<8x128xf32>
    %34 = math.tanh %33 : vector<8x128xf32>
    %cst_18 = arith.constant 1.000000e+00 : f32
    %35 = vector.broadcast %cst_18 : f32 to vector<8x128xf32>
    %36 = arith.subf %35, %27 : vector<8x128xf32>
    %37 = arith.mulf %36, %34 : vector<8x128xf32>
    %38 = arith.mulf %27, %8 : vector<8x128xf32>
    %39 = arith.addf %37, %38 : vector<8x128xf32>
    %c0_19 = arith.constant 0 : index
    %c0_20 = arith.constant 0 : index
    %40 = vector.load %arg7[%c0_19, %c0_20] : memref<64x128xf32, #tpu.memory_space<vmem>>, vector<8x128xf32>
    tpu.vector_store %arg7[%c0_19, %c0_20], %39 {strides = array<i32>} : memref<64x128xf32, #tpu.memory_space<vmem>>, vector<8x128xf32>,
    %c8 = arith.constant 8 : index
    %c0_21 = arith.constant 0 : index
    %41 = vector.load %arg8[%c8, %c0_21] : memref<64x384xf32, #tpu.memory_space<vmem>>, vector<8x384xf32>
    %c0_22 = arith.constant 0 : index
    %c0_23 = arith.constant 0 : index
    %42 = vector.load %arg4[%c0_22, %c0_23] : memref<128x384xf32, #tpu.memory_space<vmem>>, vector<128x384xf32>
    %cst_24 = arith.constant dense<0.000000e+00> : vector<8x384xf32>
    %43 = tpu.matmul %39, %42, %cst_24 {dimension_numbers = #tpu.dot_dimension_numbers<[1], [0], [0], [1], [0, 0, 1, 1], [], []>} : vector<8x128xf32>, vector<128x384xf32>, vector<8x384xf32> -> vector<8x384xf32>
    %44 = vector.extract_strided_slice %41 {offsets = [0, 0], sizes = [8, 128], strides = [1, 1]} : vector<8x384xf32> to vector<8x128xf32>
    %45 = vector.extract_strided_slice %43 {offsets = [0, 0], sizes = [8, 128], strides = [1, 1]} : vector<8x384xf32> to vector<8x128xf32>
    %46 = arith.addf %44, %45 : vector<8x128xf32>
    %47 = arith.negf %46 : vector<8x128xf32>
    %48 = math.exp %47 : vector<8x128xf32>
    %cst_25 = arith.constant 1.000000e+00 : f32
    %49 = vector.broadcast %cst_25 : f32 to vector<8x128xf32>
    %50 = arith.addf %49, %48 : vector<8x128xf32>
    %51 = arith.divf %49, %50 : vector<8x128xf32>
    %52 = vector.extract_strided_slice %41 {offsets = [0, 128], sizes = [8, 128], strides = [1, 1]} : vector<8x384xf32> to vector<8x128xf32>
    %53 = vector.extract_strided_slice %43 {offsets = [0, 128], sizes = [8, 128], strides = [1, 1]} : vector<8x384xf32> to vector<8x128xf32>
    %54 = arith.addf %52, %53 : vector<8x128xf32>
    %55 = arith.negf %54 : vector<8x128xf32>
    %56 = math.exp %55 : vector<8x128xf32>
    %cst_26 = arith.constant 1.000000e+00 : f32
    %57 = vector.broadcast %cst_26 : f32 to vector<8x128xf32>
    %58 = arith.addf %57, %56 : vector<8x128xf32>
    %59 = arith.divf %57, %58 : vector<8x128xf32>
    %60 = vector.extract_strided_slice %41 {offsets = [0, 256], sizes = [8, 128], strides = [1, 1]} : vector<8x384xf32> to vector<8x128xf32>
    %61 = vector.extract_strided_slice %43 {offsets = [0, 256], sizes = [8, 128], strides = [1, 1]} : vector<8x384xf32> to vector<8x128xf32>
    %62 = vector.broadcast %7 : vector<1x128xf32> to vector<8x128xf32>
    %63 = arith.addf %61, %62 : vector<8x128xf32>
    %64 = arith.mulf %51, %63 : vector<8x128xf32>
    %65 = arith.addf %60, %64 : vector<8x128xf32>
    %66 = math.tanh %65 : vector<8x128xf32>
    %cst_27 = arith.constant 1.000000e+00 : f32
    %67 = vector.broadcast %cst_27 : f32 to vector<8x128xf32>
    %68 = arith.subf %67, %59 : vector<8x128xf32>
    %69 = arith.mulf %68, %66 : vector<8x128xf32>
    %70 = arith.mulf %59, %39 : vector<8x128xf32>
    %71 = arith.addf %69, %70 : vector<8x128xf32>
    %c8_28 = arith.constant 8 : index
    %c0_29 = arith.constant 0 : index
    %72 = vector.load %arg7[%c8_28, %c0_29] : memref<64x128xf32, #tpu.memory_space<vmem>>, vector<8x128xf32>
    tpu.vector_store %arg7[%c8_28, %c0_29], %71 {strides = array<i32>} : memref<64x128xf32, #tpu.memory_space<vmem>>, vector<8x128xf32>,
    %c16 = arith.constant 16 : index
    %c0_30 = arith.constant 0 : index
    %73 = vector.load %arg8[%c16, %c0_30] : memref<64x384xf32, #tpu.memory_space<vmem>>, vector<8x384xf32>
    %c0_31 = arith.constant 0 : index
    %c0_32 = arith.constant 0 : index
    %74 = vector.load %arg4[%c0_31, %c0_32] : memref<128x384xf32, #tpu.memory_space<vmem>>, vector<128x384xf32>
    %cst_33 = arith.constant dense<0.000000e+00> : vector<8x384xf32>
    %75 = tpu.matmul %71, %74, %cst_33 {dimension_numbers = #tpu.dot_dimension_numbers<[1], [0], [0], [1], [0, 0, 1, 1], [], []>} : vector<8x128xf32>, vector<128x384xf32>, vector<8x384xf32> -> vector<8x384xf32>
    %76 = vector.extract_strided_slice %73 {offsets = [0, 0], sizes = [8, 128], strides = [1, 1]} : vector<8x384xf32> to vector<8x128xf32>
    %77 = vector.extract_strided_slice %75 {offsets = [0, 0], sizes = [8, 128], strides = [1, 1]} : vector<8x384xf32> to vector<8x128xf32>
    %78 = arith.addf %76, %77 : vector<8x128xf32>
    %79 = arith.negf %78 : vector<8x128xf32>
    %80 = math.exp %79 : vector<8x128xf32>
    %cst_34 = arith.constant 1.000000e+00 : f32
    %81 = vector.broadcast %cst_34 : f32 to vector<8x128xf32>
    %82 = arith.addf %81, %80 : vector<8x128xf32>
    %83 = arith.divf %81, %82 : vector<8x128xf32>
    %84 = vector.extract_strided_slice %73 {offsets = [0, 128], sizes = [8, 128], strides = [1, 1]} : vector<8x384xf32> to vector<8x128xf32>
    %85 = vector.extract_strided_slice %75 {offsets = [0, 128], sizes = [8, 128], strides = [1, 1]} : vector<8x384xf32> to vector<8x128xf32>
    %86 = arith.addf %84, %85 : vector<8x128xf32>
    %87 = arith.negf %86 : vector<8x128xf32>
    %88 = math.exp %87 : vector<8x128xf32>
    %cst_35 = arith.constant 1.000000e+00 : f32
    %89 = vector.broadcast %cst_35 : f32 to vector<8x128xf32>
    %90 = arith.addf %89, %88 : vector<8x128xf32>
    %91 = arith.divf %89, %90 : vector<8x128xf32>
    %92 = vector.extract_strided_slice %73 {offsets = [0, 256], sizes = [8, 128], strides = [1, 1]} : vector<8x384xf32> to vector<8x128xf32>
    %93 = vector.extract_strided_slice %75 {offsets = [0, 256], sizes = [8, 128], strides = [1, 1]} : vector<8x384xf32> to vector<8x128xf32>
    %94 = vector.broadcast %7 : vector<1x128xf32> to vector<8x128xf32>
    %95 = arith.addf %93, %94 : vector<8x128xf32>
    %96 = arith.mulf %83, %95 : vector<8x128xf32>
    %97 = arith.addf %92, %96 : vector<8x128xf32>
    %98 = math.tanh %97 : vector<8x128xf32>
    %cst_36 = arith.constant 1.000000e+00 : f32
    %99 = vector.broadcast %cst_36 : f32 to vector<8x128xf32>
    %100 = arith.subf %99, %91 : vector<8x128xf32>
    %101 = arith.mulf %100, %98 : vector<8x128xf32>
    %102 = arith.mulf %91, %71 : vector<8x128xf32>
    %103 = arith.addf %101, %102 : vector<8x128xf32>
    %c16_37 = arith.constant 16 : index
    %c0_38 = arith.constant 0 : index
    %104 = vector.load %arg7[%c16_37, %c0_38] : memref<64x128xf32, #tpu.memory_space<vmem>>, vector<8x128xf32>
    tpu.vector_store %arg7[%c16_37, %c0_38], %103 {strides = array<i32>} : memref<64x128xf32, #tpu.memory_space<vmem>>, vector<8x128xf32>,
    %c24 = arith.constant 24 : index
    %c0_39 = arith.constant 0 : index
    %105 = vector.load %arg8[%c24, %c0_39] : memref<64x384xf32, #tpu.memory_space<vmem>>, vector<8x384xf32>
    %c0_40 = arith.constant 0 : index
    %c0_41 = arith.constant 0 : index
    %106 = vector.load %arg4[%c0_40, %c0_41] : memref<128x384xf32, #tpu.memory_space<vmem>>, vector<128x384xf32>
    %cst_42 = arith.constant dense<0.000000e+00> : vector<8x384xf32>
    %107 = tpu.matmul %103, %106, %cst_42 {dimension_numbers = #tpu.dot_dimension_numbers<[1], [0], [0], [1], [0, 0, 1, 1], [], []>} : vector<8x128xf32>, vector<128x384xf32>, vector<8x384xf32> -> vector<8x384xf32>
    %108 = vector.extract_strided_slice %105 {offsets = [0, 0], sizes = [8, 128], strides = [1, 1]} : vector<8x384xf32> to vector<8x128xf32>
    %109 = vector.extract_strided_slice %107 {offsets = [0, 0], sizes = [8, 128], strides = [1, 1]} : vector<8x384xf32> to vector<8x128xf32>
    %110 = arith.addf %108, %109 : vector<8x128xf32>
    %111 = arith.negf %110 : vector<8x128xf32>
    %112 = math.exp %111 : vector<8x128xf32>
    %cst_43 = arith.constant 1.000000e+00 : f32
    %113 = vector.broadcast %cst_43 : f32 to vector<8x128xf32>
    %114 = arith.addf %113, %112 : vector<8x128xf32>
    %115 = arith.divf %113, %114 : vector<8x128xf32>
    %116 = vector.extract_strided_slice %105 {offsets = [0, 128], sizes = [8, 128], strides = [1, 1]} : vector<8x384xf32> to vector<8x128xf32>
    %117 = vector.extract_strided_slice %107 {offsets = [0, 128], sizes = [8, 128], strides = [1, 1]} : vector<8x384xf32> to vector<8x128xf32>
    %118 = arith.addf %116, %117 : vector<8x128xf32>
    %119 = arith.negf %118 : vector<8x128xf32>
    %120 = math.exp %119 : vector<8x128xf32>
    %cst_44 = arith.constant 1.000000e+00 : f32
    %121 = vector.broadcast %cst_44 : f32 to vector<8x128xf32>
    %122 = arith.addf %121, %120 : vector<8x128xf32>
    %123 = arith.divf %121, %122 : vector<8x128xf32>
    %124 = vector.extract_strided_slice %105 {offsets = [0, 256], sizes = [8, 128], strides = [1, 1]} : vector<8x384xf32> to vector<8x128xf32>
    %125 = vector.extract_strided_slice %107 {offsets = [0, 256], sizes = [8, 128], strides = [1, 1]} : vector<8x384xf32> to vector<8x128xf32>
    %126 = vector.broadcast %7 : vector<1x128xf32> to vector<8x128xf32>
    %127 = arith.addf %125, %126 : vector<8x128xf32>
    %128 = arith.mulf %115, %127 : vector<8x128xf32>
    %129 = arith.addf %124, %128 : vector<8x128xf32>
    %130 = math.tanh %129 : vector<8x128xf32>
    %cst_45 = arith.constant 1.000000e+00 : f32
    %131 = vector.broadcast %cst_45 : f32 to vector<8x128xf32>
    %132 = arith.subf %131, %123 : vector<8x128xf32>
    %133 = arith.mulf %132, %130 : vector<8x128xf32>
    %134 = arith.mulf %123, %103 : vector<8x128xf32>
    %135 = arith.addf %133, %134 : vector<8x128xf32>
    %c24_46 = arith.constant 24 : index
    %c0_47 = arith.constant 0 : index
    %136 = vector.load %arg7[%c24_46, %c0_47] : memref<64x128xf32, #tpu.memory_space<vmem>>, vector<8x128xf32>
    tpu.vector_store %arg7[%c24_46, %c0_47], %135 {strides = array<i32>} : memref<64x128xf32, #tpu.memory_space<vmem>>, vector<8x128xf32>,
    %c32 = arith.constant 32 : index
    %c0_48 = arith.constant 0 : index
    %137 = vector.load %arg8[%c32, %c0_48] : memref<64x384xf32, #tpu.memory_space<vmem>>, vector<8x384xf32>
    %c0_49 = arith.constant 0 : index
    %c0_50 = arith.constant 0 : index
    %138 = vector.load %arg4[%c0_49, %c0_50] : memref<128x384xf32, #tpu.memory_space<vmem>>, vector<128x384xf32>
    %cst_51 = arith.constant dense<0.000000e+00> : vector<8x384xf32>
    %139 = tpu.matmul %135, %138, %cst_51 {dimension_numbers = #tpu.dot_dimension_numbers<[1], [0], [0], [1], [0, 0, 1, 1], [], []>} : vector<8x128xf32>, vector<128x384xf32>, vector<8x384xf32> -> vector<8x384xf32>
    %140 = vector.extract_strided_slice %137 {offsets = [0, 0], sizes = [8, 128], strides = [1, 1]} : vector<8x384xf32> to vector<8x128xf32>
    %141 = vector.extract_strided_slice %139 {offsets = [0, 0], sizes = [8, 128], strides = [1, 1]} : vector<8x384xf32> to vector<8x128xf32>
    %142 = arith.addf %140, %141 : vector<8x128xf32>
    %143 = arith.negf %142 : vector<8x128xf32>
    %144 = math.exp %143 : vector<8x128xf32>
    %cst_52 = arith.constant 1.000000e+00 : f32
    %145 = vector.broadcast %cst_52 : f32 to vector<8x128xf32>
    %146 = arith.addf %145, %144 : vector<8x128xf32>
    %147 = arith.divf %145, %146 : vector<8x128xf32>
    %148 = vector.extract_strided_slice %137 {offsets = [0, 128], sizes = [8, 128], strides = [1, 1]} : vector<8x384xf32> to vector<8x128xf32>
    %149 = vector.extract_strided_slice %139 {offsets = [0, 128], sizes = [8, 128], strides = [1, 1]} : vector<8x384xf32> to vector<8x128xf32>
    %150 = arith.addf %148, %149 : vector<8x128xf32>
    %151 = arith.negf %150 : vector<8x128xf32>
    %152 = math.exp %151 : vector<8x128xf32>
    %cst_53 = arith.constant 1.000000e+00 : f32
    %153 = vector.broadcast %cst_53 : f32 to vector<8x128xf32>
    %154 = arith.addf %153, %152 : vector<8x128xf32>
    %155 = arith.divf %153, %154 : vector<8x128xf32>
    %156 = vector.extract_strided_slice %137 {offsets = [0, 256], sizes = [8, 128], strides = [1, 1]} : vector<8x384xf32> to vector<8x128xf32>
    %157 = vector.extract_strided_slice %139 {offsets = [0, 256], sizes = [8, 128], strides = [1, 1]} : vector<8x384xf32> to vector<8x128xf32>
    %158 = vector.broadcast %7 : vector<1x128xf32> to vector<8x128xf32>
    %159 = arith.addf %157, %158 : vector<8x128xf32>
    %160 = arith.mulf %147, %159 : vector<8x128xf32>
    %161 = arith.addf %156, %160 : vector<8x128xf32>
    %162 = math.tanh %161 : vector<8x128xf32>
    %cst_54 = arith.constant 1.000000e+00 : f32
    %163 = vector.broadcast %cst_54 : f32 to vector<8x128xf32>
    %164 = arith.subf %163, %155 : vector<8x128xf32>
    %165 = arith.mulf %164, %162 : vector<8x128xf32>
    %166 = arith.mulf %155, %135 : vector<8x128xf32>
    %167 = arith.addf %165, %166 : vector<8x128xf32>
    %c32_55 = arith.constant 32 : index
    %c0_56 = arith.constant 0 : index
    %168 = vector.load %arg7[%c32_55, %c0_56] : memref<64x128xf32, #tpu.memory_space<vmem>>, vector<8x128xf32>
    tpu.vector_store %arg7[%c32_55, %c0_56], %167 {strides = array<i32>} : memref<64x128xf32, #tpu.memory_space<vmem>>, vector<8x128xf32>,
    %c40 = arith.constant 40 : index
    %c0_57 = arith.constant 0 : index
    %169 = vector.load %arg8[%c40, %c0_57] : memref<64x384xf32, #tpu.memory_space<vmem>>, vector<8x384xf32>
    %c0_58 = arith.constant 0 : index
    %c0_59 = arith.constant 0 : index
    %170 = vector.load %arg4[%c0_58, %c0_59] : memref<128x384xf32, #tpu.memory_space<vmem>>, vector<128x384xf32>
    %cst_60 = arith.constant dense<0.000000e+00> : vector<8x384xf32>
    %171 = tpu.matmul %167, %170, %cst_60 {dimension_numbers = #tpu.dot_dimension_numbers<[1], [0], [0], [1], [0, 0, 1, 1], [], []>} : vector<8x128xf32>, vector<128x384xf32>, vector<8x384xf32> -> vector<8x384xf32>
    %172 = vector.extract_strided_slice %169 {offsets = [0, 0], sizes = [8, 128], strides = [1, 1]} : vector<8x384xf32> to vector<8x128xf32>
    %173 = vector.extract_strided_slice %171 {offsets = [0, 0], sizes = [8, 128], strides = [1, 1]} : vector<8x384xf32> to vector<8x128xf32>
    %174 = arith.addf %172, %173 : vector<8x128xf32>
    %175 = arith.negf %174 : vector<8x128xf32>
    %176 = math.exp %175 : vector<8x128xf32>
    %cst_61 = arith.constant 1.000000e+00 : f32
    %177 = vector.broadcast %cst_61 : f32 to vector<8x128xf32>
    %178 = arith.addf %177, %176 : vector<8x128xf32>
    %179 = arith.divf %177, %178 : vector<8x128xf32>
    %180 = vector.extract_strided_slice %169 {offsets = [0, 128], sizes = [8, 128], strides = [1, 1]} : vector<8x384xf32> to vector<8x128xf32>
    %181 = vector.extract_strided_slice %171 {offsets = [0, 128], sizes = [8, 128], strides = [1, 1]} : vector<8x384xf32> to vector<8x128xf32>
    %182 = arith.addf %180, %181 : vector<8x128xf32>
    %183 = arith.negf %182 : vector<8x128xf32>
    %184 = math.exp %183 : vector<8x128xf32>
    %cst_62 = arith.constant 1.000000e+00 : f32
    %185 = vector.broadcast %cst_62 : f32 to vector<8x128xf32>
    %186 = arith.addf %185, %184 : vector<8x128xf32>
    %187 = arith.divf %185, %186 : vector<8x128xf32>
    %188 = vector.extract_strided_slice %169 {offsets = [0, 256], sizes = [8, 128], strides = [1, 1]} : vector<8x384xf32> to vector<8x128xf32>
    %189 = vector.extract_strided_slice %171 {offsets = [0, 256], sizes = [8, 128], strides = [1, 1]} : vector<8x384xf32> to vector<8x128xf32>
    %190 = vector.broadcast %7 : vector<1x128xf32> to vector<8x128xf32>
    %191 = arith.addf %189, %190 : vector<8x128xf32>
    %192 = arith.mulf %179, %191 : vector<8x128xf32>
    %193 = arith.addf %188, %192 : vector<8x128xf32>
    %194 = math.tanh %193 : vector<8x128xf32>
    %cst_63 = arith.constant 1.000000e+00 : f32
    %195 = vector.broadcast %cst_63 : f32 to vector<8x128xf32>
    %196 = arith.subf %195, %187 : vector<8x128xf32>
    %197 = arith.mulf %196, %194 : vector<8x128xf32>
    %198 = arith.mulf %187, %167 : vector<8x128xf32>
    %199 = arith.addf %197, %198 : vector<8x128xf32>
    %c40_64 = arith.constant 40 : index
    %c0_65 = arith.constant 0 : index
    %200 = vector.load %arg7[%c40_64, %c0_65] : memref<64x128xf32, #tpu.memory_space<vmem>>, vector<8x128xf32>
    tpu.vector_store %arg7[%c40_64, %c0_65], %199 {strides = array<i32>} : memref<64x128xf32, #tpu.memory_space<vmem>>, vector<8x128xf32>,
    %c48 = arith.constant 48 : index
    %c0_66 = arith.constant 0 : index
    %201 = vector.load %arg8[%c48, %c0_66] : memref<64x384xf32, #tpu.memory_space<vmem>>, vector<8x384xf32>
    %c0_67 = arith.constant 0 : index
    %c0_68 = arith.constant 0 : index
    %202 = vector.load %arg4[%c0_67, %c0_68] : memref<128x384xf32, #tpu.memory_space<vmem>>, vector<128x384xf32>
    %cst_69 = arith.constant dense<0.000000e+00> : vector<8x384xf32>
    %203 = tpu.matmul %199, %202, %cst_69 {dimension_numbers = #tpu.dot_dimension_numbers<[1], [0], [0], [1], [0, 0, 1, 1], [], []>} : vector<8x128xf32>, vector<128x384xf32>, vector<8x384xf32> -> vector<8x384xf32>
    %204 = vector.extract_strided_slice %201 {offsets = [0, 0], sizes = [8, 128], strides = [1, 1]} : vector<8x384xf32> to vector<8x128xf32>
    %205 = vector.extract_strided_slice %203 {offsets = [0, 0], sizes = [8, 128], strides = [1, 1]} : vector<8x384xf32> to vector<8x128xf32>
    %206 = arith.addf %204, %205 : vector<8x128xf32>
    %207 = arith.negf %206 : vector<8x128xf32>
    %208 = math.exp %207 : vector<8x128xf32>
    %cst_70 = arith.constant 1.000000e+00 : f32
    %209 = vector.broadcast %cst_70 : f32 to vector<8x128xf32>
    %210 = arith.addf %209, %208 : vector<8x128xf32>
    %211 = arith.divf %209, %210 : vector<8x128xf32>
    %212 = vector.extract_strided_slice %201 {offsets = [0, 128], sizes = [8, 128], strides = [1, 1]} : vector<8x384xf32> to vector<8x128xf32>
    %213 = vector.extract_strided_slice %203 {offsets = [0, 128], sizes = [8, 128], strides = [1, 1]} : vector<8x384xf32> to vector<8x128xf32>
    %214 = arith.addf %212, %213 : vector<8x128xf32>
    %215 = arith.negf %214 : vector<8x128xf32>
    %216 = math.exp %215 : vector<8x128xf32>
    %cst_71 = arith.constant 1.000000e+00 : f32
    %217 = vector.broadcast %cst_71 : f32 to vector<8x128xf32>
    %218 = arith.addf %217, %216 : vector<8x128xf32>
    %219 = arith.divf %217, %218 : vector<8x128xf32>
    %220 = vector.extract_strided_slice %201 {offsets = [0, 256], sizes = [8, 128], strides = [1, 1]} : vector<8x384xf32> to vector<8x128xf32>
    %221 = vector.extract_strided_slice %203 {offsets = [0, 256], sizes = [8, 128], strides = [1, 1]} : vector<8x384xf32> to vector<8x128xf32>
    %222 = vector.broadcast %7 : vector<1x128xf32> to vector<8x128xf32>
    %223 = arith.addf %221, %222 : vector<8x128xf32>
    %224 = arith.mulf %211, %223 : vector<8x128xf32>
    %225 = arith.addf %220, %224 : vector<8x128xf32>
    %226 = math.tanh %225 : vector<8x128xf32>
    %cst_72 = arith.constant 1.000000e+00 : f32
    %227 = vector.broadcast %cst_72 : f32 to vector<8x128xf32>
    %228 = arith.subf %227, %219 : vector<8x128xf32>
    %229 = arith.mulf %228, %226 : vector<8x128xf32>
    %230 = arith.mulf %219, %199 : vector<8x128xf32>
    %231 = arith.addf %229, %230 : vector<8x128xf32>
    %c48_73 = arith.constant 48 : index
    %c0_74 = arith.constant 0 : index
    %232 = vector.load %arg7[%c48_73, %c0_74] : memref<64x128xf32, #tpu.memory_space<vmem>>, vector<8x128xf32>
    tpu.vector_store %arg7[%c48_73, %c0_74], %231 {strides = array<i32>} : memref<64x128xf32, #tpu.memory_space<vmem>>, vector<8x128xf32>,
    %c56 = arith.constant 56 : index
    %c0_75 = arith.constant 0 : index
    %233 = vector.load %arg8[%c56, %c0_75] : memref<64x384xf32, #tpu.memory_space<vmem>>, vector<8x384xf32>
    %c0_76 = arith.constant 0 : index
    %c0_77 = arith.constant 0 : index
    %234 = vector.load %arg4[%c0_76, %c0_77] : memref<128x384xf32, #tpu.memory_space<vmem>>, vector<128x384xf32>
    %cst_78 = arith.constant dense<0.000000e+00> : vector<8x384xf32>
    %235 = tpu.matmul %231, %234, %cst_78 {dimension_numbers = #tpu.dot_dimension_numbers<[1], [0], [0], [1], [0, 0, 1, 1], [], []>} : vector<8x128xf32>, vector<128x384xf32>, vector<8x384xf32> -> vector<8x384xf32>
    %236 = vector.extract_strided_slice %233 {offsets = [0, 0], sizes = [8, 128], strides = [1, 1]} : vector<8x384xf32> to vector<8x128xf32>
    %237 = vector.extract_strided_slice %235 {offsets = [0, 0], sizes = [8, 128], strides = [1, 1]} : vector<8x384xf32> to vector<8x128xf32>
    %238 = arith.addf %236, %237 : vector<8x128xf32>
    %239 = arith.negf %238 : vector<8x128xf32>
    %240 = math.exp %239 : vector<8x128xf32>
    %cst_79 = arith.constant 1.000000e+00 : f32
    %241 = vector.broadcast %cst_79 : f32 to vector<8x128xf32>
    %242 = arith.addf %241, %240 : vector<8x128xf32>
    %243 = arith.divf %241, %242 : vector<8x128xf32>
    %244 = vector.extract_strided_slice %233 {offsets = [0, 128], sizes = [8, 128], strides = [1, 1]} : vector<8x384xf32> to vector<8x128xf32>
    %245 = vector.extract_strided_slice %235 {offsets = [0, 128], sizes = [8, 128], strides = [1, 1]} : vector<8x384xf32> to vector<8x128xf32>
    %246 = arith.addf %244, %245 : vector<8x128xf32>
    %247 = arith.negf %246 : vector<8x128xf32>
    %248 = math.exp %247 : vector<8x128xf32>
    %cst_80 = arith.constant 1.000000e+00 : f32
    %249 = vector.broadcast %cst_80 : f32 to vector<8x128xf32>
    %250 = arith.addf %249, %248 : vector<8x128xf32>
    %251 = arith.divf %249, %250 : vector<8x128xf32>
    %252 = vector.extract_strided_slice %233 {offsets = [0, 256], sizes = [8, 128], strides = [1, 1]} : vector<8x384xf32> to vector<8x128xf32>
    %253 = vector.extract_strided_slice %235 {offsets = [0, 256], sizes = [8, 128], strides = [1, 1]} : vector<8x384xf32> to vector<8x128xf32>
    %254 = vector.broadcast %7 : vector<1x128xf32> to vector<8x128xf32>
    %255 = arith.addf %253, %254 : vector<8x128xf32>
    %256 = arith.mulf %243, %255 : vector<8x128xf32>
    %257 = arith.addf %252, %256 : vector<8x128xf32>
    %258 = math.tanh %257 : vector<8x128xf32>
    %cst_81 = arith.constant 1.000000e+00 : f32
    %259 = vector.broadcast %cst_81 : f32 to vector<8x128xf32>
    %260 = arith.subf %259, %251 : vector<8x128xf32>
    %261 = arith.mulf %260, %258 : vector<8x128xf32>
    %262 = arith.mulf %251, %231 : vector<8x128xf32>
    %263 = arith.addf %261, %262 : vector<8x128xf32>
    %c56_82 = arith.constant 56 : index
    %c0_83 = arith.constant 0 : index
    %264 = vector.load %arg7[%c56_82, %c0_83] : memref<64x128xf32, #tpu.memory_space<vmem>>, vector<8x128xf32>
    tpu.vector_store %arg7[%c56_82, %c0_83], %263 {strides = array<i32>} : memref<64x128xf32, #tpu.memory_space<vmem>>, vector<8x128xf32>,
    return
  }
  func.func @transform_0(%arg0: i32) -> (i32, i32) {
    %c0_i32 = arith.constant 0 : i32
    %c0_i32_0 = arith.constant 0 : i32
    %c0_i32_1 = arith.constant 0 : i32
    return %c0_i32, %c0_i32_0 : i32, i32
  }
  func.func @transform_1(%arg0: i32) -> (i32, i32) {
    %c0_i32 = arith.constant 0 : i32
    %c0_i32_0 = arith.constant 0 : i32
    %c0_i32_1 = arith.constant 0 : i32
    return %c0_i32, %c0_i32_0 : i32, i32
  }
  func.func @transform_2(%arg0: i32) -> (i32, i32) {
    %c0_i32 = arith.constant 0 : i32
    %c0_i32_0 = arith.constant 0 : i32
    %c0_i32_1 = arith.constant 0 : i32
    return %c0_i32, %c0_i32_0 : i32, i32
  }
  func.func @transform_3(%arg0: i32) -> (i32, i32) {
    %c0_i32 = arith.constant 0 : i32
    %c0_i32_0 = arith.constant 0 : i32
    %c0_i32_1 = arith.constant 0 : i32
    return %c0_i32, %c0_i32_0 : i32, i32
  }
  func.func @transform_4(%arg0: i32) -> (i32, i32) {
    %c0_i32 = arith.constant 0 : i32
    %c0_i32_0 = arith.constant 0 : i32
    %c0_i32_1 = arith.constant 0 : i32
    return %c0_i32, %c0_i32_0 : i32, i32
  }
  func.func @transform_5(%arg0: i32) -> (i32, i32) {
    %c0_i32 = arith.constant 0 : i32
    %c0_i32_0 = arith.constant 0 : i32
    %c0_i32_1 = arith.constant 0 : i32
    return %c0_i32, %c0_i32_0 : i32, i32
  }
  func.func @transform_6(%arg0: i32) -> (i32, i32) {
    %c0_i32 = arith.constant 0 : i32
    %c0_i32_0 = arith.constant 0 : i32
    %c0_i32_1 = arith.constant 0 : i32
    return %c0_i32, %c0_i32_0 : i32, i32
  }
}

</mosaic_0001>

<llo_original>
// kernel: tpu_custom_call.1
$region0: #{tpu_custom_call.1}
  #allocation0 [shape = 'u32[]', space=smem, size = 0x4, offset = 0x4, fixed_abs, tag = 'smem constant byte address 0x4 - core index']
  #allocation1 [shape = 'u32[144,128]{1,0:T(1,128)}', space=vmem, size = 0x12000, scoped, tag = 'internal scratch']
  #allocation2 [shape = 'f32[64,384]{1,0:T(8,128)}', space=vmem, size = 0x18000, scoped, tag = 'scratch operand']
  %s0 = inlined_call_operand.hbm [shape: f32[64,128], index: 0, kind: input, shape index: {}]
  %s1 = inlined_call_operand.hbm [shape: f32[8,128], index: 1, kind: input, shape index: {}]
  %s2 = inlined_call_operand.hbm [shape: f32[128,384], index: 2, kind: input, shape index: {}]
  %s3 = inlined_call_operand.hbm [shape: f32[128,384], index: 3, kind: input, shape index: {}]
  %s4 = inlined_call_operand.vmem [shape: f32[1,384], index: 4, kind: input, shape index: {}]
  %s5 = inlined_call_operand.vmem [shape: f32[1,128], index: 5, kind: input, shape index: {}]
  %s6 = inlined_call_operand.hbm [shape: f32[64,128], index: 6, kind: output, shape index: {}]
  %s7 = sld [smem:[#allocation0]]
  $region50: #{tpu_custom_call.1} parent=0
    _
  %s9 = ssub.s32 1, %s7
  %s10 = scalar_select 0, %s9, %s7
  $region1: #{tpu_custom_call.1} parent=0
    #allocation3 [shape = 'u8[32768]{0}', space=vmem, size = 0x8000, scoped, tag = 'input window, operand 0, single buffered']
    #allocation4 [shape = 's32[1]{0}', space=sflag, size = 0x4, scoped, tag = 'scoped memory for tpu_custom_call.1']
    #allocation5 [shape = 's32[1]{0}', space=sflag, size = 0x4, scoped, tag = 'scoped memory for tpu_custom_call.1']
    #allocation6 [shape = 'u8[4096]{0}', space=vmem, size = 0x1000, scoped, tag = 'input window, operand 1, single buffered']
    #allocation7 [shape = 's32[1]{0}', space=sflag, size = 0x4, scoped, tag = 'scoped memory for tpu_custom_call.1']
    #allocation8 [shape = 'u8[196608]{0}', space=vmem, size = 0x30000, scoped, tag = 'input window, operand 2, single buffered']
    #allocation9 [shape = 'u8[196608]{0}', space=vmem, size = 0x30000, scoped, tag = 'input window, operand 3, single buffered']
    #allocation10 [shape = 's32[1]{0}', space=sflag, size = 0x4, scoped, tag = 'scoped memory for tpu_custom_call.1']
    #allocation11 [shape = 'u8[32768]{0}', space=vmem, size = 0x8000, scoped, tag = 'output window, operand 0, single buffered']
    %11 = vsyncpa [#allocation4], 0
    %12 = vsyncpa [#allocation7], 0
    %13 = vsyncpa [#allocation10], 0
    %14 = vsyncpa [#allocation5], 0
    // Predicated region
    $region2: #{tpu_custom_call.1} parent=1 // pred_check
      _
    $region3: #{tpu_custom_call.1} parent=1 // pred_check_branch
      %16 = sbr.rel (0) target = $region5
    $region4: #{tpu_custom_call.1} parent=1 // pred_region
      %s18 = ssub.s32 1024, 1024
      %19 = vsyncadd [#allocation4], %s18
      %s20 = sshll.u32 [#allocation3], 4
      %s21 = int_to_ptr.vmem [resolvable:$true] %s20
      %26 = dma.hbm_to_vmem [thread:$0]  %s0, 1024, %s21, [#allocation4], 128, 128, 8
    $region5: #{tpu_custom_call.1} parent=1 // pred_fallthru
      _
    // Predicated region
    $region6: #{tpu_custom_call.1} parent=1 // pred_check
      _
    $region7: #{tpu_custom_call.1} parent=1 // pred_check_branch
      %28 = sbr.rel (0) target = $region9
    $region8: #{tpu_custom_call.1} parent=1 // pred_region
      %s30 = ssub.s32 128, 128
      %31 = vsyncadd [#allocation7], %s30
      %s33 = sshll.u32 [#allocation6], 4
      %s34 = int_to_ptr.vmem [resolvable:$true] %s33
      %36 = dma.hbm_to_vmem [thread:$0]  %s1, 128, %s34, [#allocation7]
    $region9: #{tpu_custom_call.1} parent=1 // pred_fallthru
      _
    // Predicated region
    $region10: #{tpu_custom_call.1} parent=1 // pred_check
      _
    $region11: #{tpu_custom_call.1} parent=1 // pred_check_branch
      %38 = sbr.rel (0) target = $region13
    $region12: #{tpu_custom_call.1} parent=1 // pred_region
      %s40 = ssub.s32 6144, 6144
      %41 = vsyncadd [#allocation7], %s40
      %s42 = sshll.u32 [#allocation8], 4
      %s43 = int_to_ptr.vmem [resolvable:$true] %s42
      %48 = dma.hbm_to_vmem [thread:$0]  %s2, 6144, %s43, [#allocation7], 384, 384, 24
    $region13: #{tpu_custom_call.1} parent=1 // pred_fallthru
      _
    // Predicated region
    $region14: #{tpu_custom_call.1} parent=1 // pred_check
      _
    $region15: #{tpu_custom_call.1} parent=1 // pred_check_branch
      %50 = sbr.rel (0) target = $region17
    $region16: #{tpu_custom_call.1} parent=1 // pred_region
      %s52 = ssub.s32 6144, 6144
      %53 = vsyncadd [#allocation10], %s52
      %s54 = sshll.u32 [#allocation9], 4
      %s55 = int_to_ptr.vmem [resolvable:$true] %s54
      %60 = dma.hbm_to_vmem [thread:$0]  %s3, 6144, %s55, [#allocation10], 384, 384, 24
    $region17: #{tpu_custom_call.1} parent=1 // pred_fallthru
      _
    // Predicated region
    $region18: #{tpu_custom_call.1} parent=1 // pred_check
      _
    $region19: #{tpu_custom_call.1} parent=1 // pred_check_branch
      %62 = sbr.rel (0) target = $region21
    $region20: #{tpu_custom_call.1} parent=1 // pred_region
      _
    $region21: #{tpu_custom_call.1} parent=1 // pred_fallthru
      _
    // Predicated region
    $region22: #{tpu_custom_call.1} parent=1 // pred_check
      _
    $region23: #{tpu_custom_call.1} parent=1 // pred_check_branch
      %64 = sbr.rel (0) target = $region25
    $region24: #{tpu_custom_call.1} parent=1 // pred_region
      _
    $region25: #{tpu_custom_call.1} parent=1 // pred_fallthru
      _
    // Predicated region
    $region26: #{tpu_custom_call.1} parent=1 // pred_check
      _
    $region27: #{tpu_custom_call.1} parent=1 // pred_check_branch
      %66 = sbr.rel (0) target = $region29
    $region28: #{tpu_custom_call.1} parent=1 // pred_region
      %67 = dma.done [#allocation4], 1024
    $region29: #{tpu_custom_call.1} parent=1 // pred_fallthru
      _
    // Predicated region
    $region30: #{tpu_custom_call.1} parent=1 // pred_check
      _
    $region31: #{tpu_custom_call.1} parent=1 // pred_check_branch
      %69 = sbr.rel (0) target = $region33
    $region32: #{tpu_custom_call.1} parent=1 // pred_region
      %70 = dma.done [#allocation7], 128
    $region33: #{tpu_custom_call.1} parent=1 // pred_fallthru
      _
    // Predicated region
    $region34: #{tpu_custom_call.1} parent=1 // pred_check
      _
    $region35: #{tpu_custom_call.1} parent=1 // pred_check_branch
      %72 = sbr.rel (0) target = $region37
    $region36: #{tpu_custom_call.1} parent=1 // pred_region
      %73 = dma.done [#allocation7], 6144
    $region37: #{tpu_custom_call.1} parent=1 // pred_fallthru
      _
    // Predicated region
    $region38: #{tpu_custom_call.1} parent=1 // pred_check
      _
    $region39: #{tpu_custom_call.1} parent=1 // pred_check_branch
      %75 = sbr.rel (0) target = $region41
    $region40: #{tpu_custom_call.1} parent=1 // pred_region
      %76 = dma.done [#allocation10], 6144
    $region41: #{tpu_custom_call.1} parent=1 // pred_fallthru
      _
    %v77 = vld [vmem:[#allocation3] sm:$0xff]
    %v78 = vld [vmem:[#allocation3 + $0x8] sm:$0xff]
    %v79 = vld [vmem:[#allocation3 + $0x10] sm:$0xff]
    %v80 = vld [vmem:[#allocation3 + $0x18] sm:$0xff]
    %v81 = vld [vmem:[#allocation3 + $0x20] sm:$0xff]
    %v82 = vld [vmem:[#allocation3 + $0x28] sm:$0xff]
    %v83 = vld [vmem:[#allocation3 + $0x30] sm:$0xff]
    %v84 = vld [vmem:[#allocation3 + $0x38] sm:$0xff]
    %v85 = vld [vmem:[#allocation8] sm:$0xff]
    %v86 = vld [vmem:[#allocation8 + $0x8] sm:$0xff]
    %v87 = vld [vmem:[#allocation8 + $0x10] sm:$0xff]
    %v88 = vld [vmem:[#allocation8 + $0x18] sm:$0xff]
    %v89 = vld [vmem:[#allocation8 + $0x20] sm:$0xff]
    %v90 = vld [vmem:[#allocation8 + $0x28] sm:$0xff]
    %v91 = vld [vmem:[#allocation8 + $0x30] sm:$0xff]
    %v92 = vld [vmem:[#allocation8 + $0x38] sm:$0xff]
    %v93 = vld [vmem:[#allocation8 + $0x40] sm:$0xff]
    %v94 = vld [vmem:[#allocation8 + $0x48] sm:$0xff]
    %v95 = vld [vmem:[#allocation8 + $0x50] sm:$0xff]
    %v96 = vld [vmem:[#allocation8 + $0x58] sm:$0xff]
    %v97 = vld [vmem:[#allocation8 + $0x60] sm:$0xff]
    %v98 = vld [vmem:[#allocation8 + $0x68] sm:$0xff]
    %v99 = vld [vmem:[#allocation8 + $0x70] sm:$0xff]
    %v100 = vld [vmem:[#allocation8 + $0x78] sm:$0xff]
    %v101 = vld [vmem:[#allocation8 + $0x80] sm:$0xff]
    %v102 = vld [vmem:[#allocation8 + $0x88] sm:$0xff]
    %v103 = vld [vmem:[#allocation8 + $0x90] sm:$0xff]
    %v104 = vld [vmem:[#allocation8 + $0x98] sm:$0xff]
    %v105 = vld [vmem:[#allocation8 + $0xa0] sm:$0xff]
    %v106 = vld [vmem:[#allocation8 + $0xa8] sm:$0xff]
    %v107 = vld [vmem:[#allocation8 + $0xb0] sm:$0xff]
    %v108 = vld [vmem:[#allocation8 + $0xb8] sm:$0xff]
    %v109 = vld [vmem:[#allocation8 + $0xc0] sm:$0xff]
    %v110 = vld [vmem:[#allocation8 + $0xc8] sm:$0xff]
    %v111 = vld [vmem:[#allocation8 + $0xd0] sm:$0xff]
    %v112 = vld [vmem:[#allocation8 + $0xd8] sm:$0xff]
    %v113 = vld [vmem:[#allocation8 + $0xe0] sm:$0xff]
    %v114 = vld [vmem:[#allocation8 + $0xe8] sm:$0xff]
    %v115 = vld [vmem:[#allocation8 + $0xf0] sm:$0xff]
    %v116 = vld [vmem:[#allocation8 + $0xf8] sm:$0xff]
    %v117 = vld [vmem:[#allocation8 + $0x100] sm:$0xff]
    %v118 = vld [vmem:[#allocation8 + $0x108] sm:$0xff]
    %v119 = vld [vmem:[#allocation8 + $0x110] sm:$0xff]
    %v120 = vld [vmem:[#allocation8 + $0x118] sm:$0xff]
    %v121 = vld [vmem:[#allocation8 + $0x120] sm:$0xff]
    %v122 = vld [vmem:[#allocation8 + $0x128] sm:$0xff]
    %v123 = vld [vmem:[#allocation8 + $0x130] sm:$0xff]
    %v124 = vld [vmem:[#allocation8 + $0x138] sm:$0xff]
    %v125 = vld [vmem:[#allocation8 + $0x140] sm:$0xff]
    %v126 = vld [vmem:[#allocation8 + $0x148] sm:$0xff]
    %v127 = vld [vmem:[#allocation8 + $0x150] sm:$0xff]
    %v128 = vld [vmem:[#allocation8 + $0x158] sm:$0xff]
    %v129 = vld [vmem:[#allocation8 + $0x160] sm:$0xff]
    %v130 = vld [vmem:[#allocation8 + $0x168] sm:$0xff]
    %v131 = vld [vmem:[#allocation8 + $0x170] sm:$0xff]
    %v132 = vld [vmem:[#allocation8 + $0x178] sm:$0xff]
    %v133 = vld [vmem:[%s4] sm:$0x7]
    %v135 = vlaneseq
    %v136 = vshrl.u32 %v135, 7
    %v137 = vsub.s32 0, %v136
    %v138 = vrot.slane %v133, %v137
    %v139 = vlaneseq
    %v140 = vshrl.u32 %v139, 7
    %v141 = vsub.s32 1, %v140
    %v142 = vrot.slane %v133, %v141
    %v143 = vlaneseq
    %v144 = vshrl.u32 %v143, 7
    %v145 = vsub.s32 2, %v144
    %v146 = vrot.slane %v133, %v145
    %150 = vmatprep.subr.mxu0 %v86
    %151 = vmatpush1.msra.mxu0 %v85
    %152 = vmatprep.subr.mxu0 %v89
    %153 = vmatpush1.msra.mxu0 %v88
    %154 = vmatprep.subr.mxu0 %v92
    %155 = vmatpush1.msra.mxu0 %v91
    %156 = vmatprep.subr.mxu0 %v95
    %157 = vmatpush1.msra.mxu0 %v94
    %158 = vmatprep.subr.mxu0 %v98
    %159 = vmatpush1.msra.mxu0 %v97
    %160 = vmatprep.subr.mxu0 %v101
    %161 = vmatpush1.msra.mxu0 %v100
    %162 = vmatprep.subr.mxu0 %v104
    %163 = vmatpush1.msra.mxu0 %v103
    %164 = vmatprep.subr.mxu0 %v107
    %165 = vmatpush1.msra.mxu0 %v106
    %166 = vmatprep.subr.mxu0 %v110
    %167 = vmatpush1.msra.mxu0 %v109
    %168 = vmatprep.subr.mxu0 %v113
    %169 = vmatpush1.msra.mxu0 %v112
    %170 = vmatprep.subr.mxu0 %v116
    %171 = vmatpush1.msra.mxu0 %v115
    %172 = vmatprep.subr.mxu0 %v119
    %173 = vmatpush1.msra.mxu0 %v118
    %174 = vmatprep.subr.mxu0 %v122
    %175 = vmatpush1.msra.mxu0 %v121
    %176 = vmatprep.subr.mxu0 %v125
    %177 = vmatpush1.msra.mxu0 %v124
    %178 = vmatprep.subr.mxu0 %v128
    %179 = vmatpush1.msra.mxu0 %v127
    %180 = vmatprep.subr.mxu0 %v131
    %181 = vmatpush1.msra.mxu0 %v130
    %182 = vmatprep.subr.mxu0 0.0
    %183 = vmatpush1.msra.mxu0 0.0
    %184 = vmatprep.subr.mxu0 0.0
    %185 = vmatpush1.msra.mxu0 0.0
    %186 = vmatprep.subr.mxu0 0.0
    %187 = vmatpush1.msra.mxu0 0.0
    %188 = vmatprep.subr.mxu0 0.0
    %189 = vmatpush1.msra.mxu0 0.0
    %190 = vmatprep.subr.mxu0 0.0
    %191 = vmatpush1.msra.mxu0 0.0
    %192 = vmatprep.subr.mxu0 0.0
    %193 = vmatpush1.msra.mxu0 0.0
    %194 = vmatprep.subr.mxu0 0.0
    %195 = vmatpush1.msra.mxu0 0.0
    %196 = vmatprep.subr.mxu0 0.0
    %197 = vmatpush1.msra.mxu0 0.0
    %198 = vmatprep.subr.mxu0 0.0
    %199 = vmatpush1.msra.mxu0 0.0
    %200 = vmatprep.subr.mxu0 0.0
    %201 = vmatpush1.msra.mxu0 0.0
    %202 = vmatprep.subr.mxu0 0.0
    %203 = vmatpush1.msra.mxu0 0.0
    %204 = vmatprep.subr.mxu0 0.0
    %205 = vmatpush1.msra.mxu0 0.0
    %206 = vmatprep.subr.mxu0 0.0
    %207 = vmatpush1.msra.mxu0 0.0
    %208 = vmatprep.subr.mxu0 0.0
    %209 = vmatpush1.msra.mxu0 0.0
    %210 = vmatprep.subr.mxu0 0.0
    %211 = vmatpush1.msra.mxu0 0.0
    %212 = vmatprep.subr.mxu0 0.0
    %213 = vmatpush1.msra.mxu0 0.0
    %214 = vmatprep.mubr.f32.mxu0 0.0
    %215 = vmatmul.mubr.f32.gmra.mrb[0].mxu0 %v77
    %v216 = vpop.f32.mrb[0].mxu0
    %v217 = vadd.f32 %v138, %v216
    %v218 = vpop.f32.mrb[0].mxu0
    %v219 = vadd.f32 %v142, %v218
    %220 = vmatprep.mubr.f32.mxu0 0.0
    %221 = vmatmul.mubr.f32.gmra.mrb[0].mxu0 %v78
    %v222 = vpop.f32.mrb[0].mxu0
    %v223 = vadd.f32 %v138, %v222
    %v224 = vpop.f32.mrb[0].mxu0
    %v225 = vadd.f32 %v142, %v224
    %226 = vmatprep.mubr.f32.mxu0 0.0
    %227 = vmatmul.mubr.f32.gmra.mrb[0].mxu0 %v79
    %v228 = vpop.f32.mrb[0].mxu0
    %v229 = vadd.f32 %v138, %v228
    %v230 = vpop.f32.mrb[0].mxu0
    %v231 = vadd.f32 %v142, %v230
    %232 = vmatprep.mubr.f32.mxu0 0.0
    %233 = vmatmul.mubr.f32.gmra.mrb[0].mxu0 %v80
    %v234 = vpop.f32.mrb[0].mxu0
    %v235 = vadd.f32 %v138, %v234
    %v236 = vpop.f32.mrb[0].mxu0
    %v237 = vadd.f32 %v142, %v236
    %238 = vmatprep.mubr.f32.mxu0 0.0
    %239 = vmatmul.mubr.f32.gmra.mrb[0].mxu0 %v81
    %v240 = vpop.f32.mrb[0].mxu0
    %v241 = vadd.f32 %v138, %v240
    %v242 = vpop.f32.mrb[0].mxu0
    %v243 = vadd.f32 %v142, %v242
    %244 = vmatprep.mubr.f32.mxu0 0.0
    %245 = vmatmul.mubr.f32.gmra.mrb[0].mxu0 %v82
    %v246 = vpop.f32.mrb[0].mxu0
    %v247 = vadd.f32 %v138, %v246
    %v248 = vpop.f32.mrb[0].mxu0
    %v249 = vadd.f32 %v142, %v248
    %250 = vmatprep.mubr.f32.mxu0 0.0
    %251 = vmatmul.mubr.f32.gmra.mrb[0].mxu0 %v83
    %v252 = vpop.f32.mrb[0].mxu0
    %v253 = vadd.f32 %v138, %v252
    %v254 = vpop.f32.mrb[0].mxu0
    %v255 = vadd.f32 %v142, %v254
    %256 = vmatprep.mubr.f32.mxu0 0.0
    %257 = vmatmul.mubr.f32.gmra.mrb[0].mxu0 %v84
    %v258 = vpop.f32.mrb[0].mxu0
    %v259 = vadd.f32 %v138, %v258
    %v260 = vpop.f32.mrb[0].mxu0
    %v261 = vadd.f32 %v142, %v260
    %262 = vdwg.mxu0
    %263 = vmatprep.subr.mxu0 0.0
    %264 = vmatpush1.msra.mxu0 %v87
    %265 = vmatprep.subr.mxu0 0.0
    %266 = vmatpush1.msra.mxu0 %v90
    %267 = vmatprep.subr.mxu0 0.0
    %268 = vmatpush1.msra.mxu0 %v93
    %269 = vmatprep.subr.mxu0 0.0
    %270 = vmatpush1.msra.mxu0 %v96
    %271 = vmatprep.subr.mxu0 0.0
    %272 = vmatpush1.msra.mxu0 %v99
    %273 = vmatprep.subr.mxu0 0.0
    %274 = vmatpush1.msra.mxu0 %v102
    %275 = vmatprep.subr.mxu0 0.0
    %276 = vmatpush1.msra.mxu0 %v105
    %277 = vmatprep.subr.mxu0 0.0
    %278 = vmatpush1.msra.mxu0 %v108
    %279 = vmatprep.subr.mxu0 0.0
    %280 = vmatpush1.msra.mxu0 %v111
    %281 = vmatprep.subr.mxu0 0.0
    %282 = vmatpush1.msra.mxu0 %v114
    %283 = vmatprep.subr.mxu0 0.0
    %284 = vmatpush1.msra.mxu0 %v117
    %285 = vmatprep.subr.mxu0 0.0
    %286 = vmatpush1.msra.mxu0 %v120
    %287 = vmatprep.subr.mxu0 0.0
    %288 = vmatpush1.msra.mxu0 %v123
    %289 = vmatprep.subr.mxu0 0.0
    %290 = vmatpush1.msra.mxu0 %v126
    %291 = vmatprep.subr.mxu0 0.0
    %292 = vmatpush1.msra.mxu0 %v129
    %293 = vmatprep.subr.mxu0 0.0
    %294 = vmatpush1.msra.mxu0 %v132
    %295 = vmatprep.subr.mxu0 0.0
    %296 = vmatpush1.msra.mxu0 0.0
    %297 = vmatprep.subr.mxu0 0.0
    %298 = vmatpush1.msra.mxu0 0.0
    %299 = vmatprep.subr.mxu0 0.0
    %300 = vmatpush1.msra.mxu0 0.0
    %301 = vmatprep.subr.mxu0 0.0
    %302 = vmatpush1.msra.mxu0 0.0
    %303 = vmatprep.subr.mxu0 0.0
    %304 = vmatpush1.msra.mxu0 0.0
    %305 = vmatprep.subr.mxu0 0.0
    %306 = vmatpush1.msra.mxu0 0.0
    %307 = vmatprep.subr.mxu0 0.0
    %308 = vmatpush1.msra.mxu0 0.0
    %309 = vmatprep.subr.mxu0 0.0
    %310 = vmatpush1.msra.mxu0 0.0
    %311 = vmatprep.subr.mxu0 0.0
    %312 = vmatpush1.msra.mxu0 0.0
    %313 = vmatprep.subr.mxu0 0.0
    %314 = vmatpush1.msra.mxu0 0.0
    %315 = vmatprep.subr.mxu0 0.0
    %316 = vmatpush1.msra.mxu0 0.0
    %317 = vmatprep.subr.mxu0 0.0
    %318 = vmatpush1.msra.mxu0 0.0
    %319 = vmatprep.subr.mxu0 0.0
    %320 = vmatpush1.msra.mxu0 0.0
    %321 = vmatprep.subr.mxu0 0.0
    %322 = vmatpush1.msra.mxu0 0.0
    %323 = vmatprep.subr.mxu0 0.0
    %324 = vmatpush1.msra.mxu0 0.0
    %325 = vmatprep.subr.mxu0 0.0
    %326 = vmatpush1.msra.mxu0 0.0
    %327 = vmatprep.mubr.f32.mxu0 0.0
    %328 = vmatmul.mubr.f32.gmra.mrb[0].mxu0 %v77
    %v329 = vpop.f32.mrb[0].mxu0
    %v330 = vadd.f32 %v146, %v329
    %v331 = vpop.f32.mrb[0].mxu0
    %332 = vmatprep.mubr.f32.mxu0 0.0
    %333 = vmatmul.mubr.f32.gmra.mrb[0].mxu0 %v78
    %v334 = vpop.f32.mrb[0].mxu0
    %v335 = vadd.f32 %v146, %v334
    %v336 = vpop.f32.mrb[0].mxu0
    %337 = vmatprep.mubr.f32.mxu0 0.0
    %338 = vmatmul.mubr.f32.gmra.mrb[0].mxu0 %v79
    %v339 = vpop.f32.mrb[0].mxu0
    %v340 = vadd.f32 %v146, %v339
    %v341 = vpop.f32.mrb[0].mxu0
    %342 = vmatprep.mubr.f32.mxu0 0.0
    %343 = vmatmul.mubr.f32.gmra.mrb[0].mxu0 %v80
    %v344 = vpop.f32.mrb[0].mxu0
    %v345 = vadd.f32 %v146, %v344
    %v346 = vpop.f32.mrb[0].mxu0
    %347 = vmatprep.mubr.f32.mxu0 0.0
    %348 = vmatmul.mubr.f32.gmra.mrb[0].mxu0 %v81
    %v349 = vpop.f32.mrb[0].mxu0
    %v350 = vadd.f32 %v146, %v349
    %v351 = vpop.f32.mrb[0].mxu0
    %352 = vmatprep.mubr.f32.mxu0 0.0
    %353 = vmatmul.mubr.f32.gmra.mrb[0].mxu0 %v82
    %v354 = vpop.f32.mrb[0].mxu0
    %v355 = vadd.f32 %v146, %v354
    %v356 = vpop.f32.mrb[0].mxu0
    %357 = vmatprep.mubr.f32.mxu0 0.0
    %358 = vmatmul.mubr.f32.gmra.mrb[0].mxu0 %v83
    %v359 = vpop.f32.mrb[0].mxu0
    %v360 = vadd.f32 %v146, %v359
    %v361 = vpop.f32.mrb[0].mxu0
    %362 = vmatprep.mubr.f32.mxu0 0.0
    %363 = vmatmul.mubr.f32.gmra.mrb[0].mxu0 %v84
    %v364 = vpop.f32.mrb[0].mxu0
    %v365 = vadd.f32 %v146, %v364
    %v366 = vpop.f32.mrb[0].mxu0
    %367 = vdwg.mxu0
    %368 = vst [vmem:[#allocation2] sm:$0xff] %v217
    %369 = vst [vmem:[#allocation2 + $0x8] sm:$0xff] %v219
    %370 = vst [vmem:[#allocation2 + $0x10] sm:$0xff] %v330
    %371 = vst [vmem:[#allocation2 + $0x18] sm:$0xff] %v223
    %372 = vst [vmem:[#allocation2 + $0x20] sm:$0xff] %v225
    %373 = vst [vmem:[#allocation2 + $0x28] sm:$0xff] %v335
    %374 = vst [vmem:[#allocation2 + $0x30] sm:$0xff] %v229
    %375 = vst [vmem:[#allocation2 + $0x38] sm:$0xff] %v231
    %376 = vst [vmem:[#allocation2 + $0x40] sm:$0xff] %v340
    %377 = vst [vmem:[#allocation2 + $0x48] sm:$0xff] %v235
    %378 = vst [vmem:[#allocation2 + $0x50] sm:$0xff] %v237
    %379 = vst [vmem:[#allocation2 + $0x58] sm:$0xff] %v345
    %380 = vst [vmem:[#allocation2 + $0x60] sm:$0xff] %v241
    %381 = vst [vmem:[#allocation2 + $0x68] sm:$0xff] %v243
    %382 = vst [vmem:[#allocation2 + $0x70] sm:$0xff] %v350
    %383 = vst [vmem:[#allocation2 + $0x78] sm:$0xff] %v247
    %384 = vst [vmem:[#allocation2 + $0x80] sm:$0xff] %v249
    %385 = vst [vmem:[#allocation2 + $0x88] sm:$0xff] %v355
    %386 = vst [vmem:[#allocation2 + $0x90] sm:$0xff] %v253
    %387 = vst [vmem:[#allocation2 + $0x98] sm:$0xff] %v255
    %388 = vst [vmem:[#allocation2 + $0xa0] sm:$0xff] %v360
    %389 = vst [vmem:[#allocation2 + $0xa8] sm:$0xff] %v259
    %390 = vst [vmem:[#allocation2 + $0xb0] sm:$0xff] %v261
    %391 = vst [vmem:[#allocation2 + $0xb8] sm:$0xff] %v365
    %v392 = vld [vmem:[%s5] sm:$0x1]
    %v393 = vld [vmem:[#allocation6] sm:$0xff]
    %v394 = vld [vmem:[#allocation2] sm:$0xff]
    %v395 = vld [vmem:[#allocation2 + $0x8] sm:$0xff]
    %v396 = vld [vmem:[#allocation2 + $0x10] sm:$0xff]
    %v397 = vld [vmem:[#allocation9] sm:$0xff]
    %v398 = vld [vmem:[#allocation9 + $0x8] sm:$0xff]
    %v399 = vld [vmem:[#allocation9 + $0x10] sm:$0xff]
    %v400 = vld [vmem:[#allocation9 + $0x18] sm:$0xff]
    %v401 = vld [vmem:[#allocation9 + $0x20] sm:$0xff]
    %v402 = vld [vmem:[#allocation9 + $0x28] sm:$0xff]
    %v403 = vld [vmem:[#allocation9 + $0x30] sm:$0xff]
    %v404 = vld [vmem:[#allocation9 + $0x38] sm:$0xff]
    %v405 = vld [vmem:[#allocation9 + $0x40] sm:$0xff]
    %v406 = vld [vmem:[#allocation9 + $0x48] sm:$0xff]
    %v407 = vld [vmem:[#allocation9 + $0x50] sm:$0xff]
    %v408 = vld [vmem:[#allocation9 + $0x58] sm:$0xff]
    %v409 = vld [vmem:[#allocation9 + $0x60] sm:$0xff]
    %v410 = vld [vmem:[#allocation9 + $0x68] sm:$0xff]
    %v411 = vld [vmem:[#allocation9 + $0x70] sm:$0xff]
    %v412 = vld [vmem:[#allocation9 + $0x78] sm:$0xff]
    %v413 = vld [vmem:[#allocation9 + $0x80] sm:$0xff]
    %v414 = vld [vmem:[#allocation9 + $0x88] sm:$0xff]
    %v415 = vld [vmem:[#allocation9 + $0x90] sm:$0xff]
    %v416 = vld [vmem:[#allocation9 + $0x98] sm:$0xff]
    %v417 = vld [vmem:[#allocation9 + $0xa0] sm:$0xff]
    %v418 = vld [vmem:[#allocation9 + $0xa8] sm:$0xff]
    %v419 = vld [vmem:[#allocation9 + $0xb0] sm:$0xff]
    %v420 = vld [vmem:[#allocation9 + $0xb8] sm:$0xff]
    %v421 = vld [vmem:[#allocation9 + $0xc0] sm:$0xff]
    %v422 = vld [vmem:[#allocation9 + $0xc8] sm:$0xff]
    %v423 = vld [vmem:[#allocation9 + $0xd0] sm:$0xff]
    %v424 = vld [vmem:[#allocation9 + $0xd8] sm:$0xff]
    %v425 = vld [vmem:[#allocation9 + $0xe0] sm:$0xff]
    %v426 = vld [vmem:[#allocation9 + $0xe8] sm:$0xff]
    %v427 = vld [vmem:[#allocation9 + $0xf0] sm:$0xff]
    %v428 = vld [vmem:[#allocation9 + $0xf8] sm:$0xff]
    %v429 = vld [vmem:[#allocation9 + $0x100] sm:$0xff]
    %v430 = vld [vmem:[#allocation9 + $0x108] sm:$0xff]
    %v431 = vld [vmem:[#allocation9 + $0x110] sm:$0xff]
    %v432 = vld [vmem:[#allocation9 + $0x118] sm:$0xff]
    %v433 = vld [vmem:[#allocation9 + $0x120] sm:$0xff]
    %v434 = vld [vmem:[#allocation9 + $0x128] sm:$0xff]
    %v435 = vld [vmem:[#allocation9 + $0x130] sm:$0xff]
    %v436 = vld [vmem:[#allocation9 + $0x138] sm:$0xff]
    %v437 = vld [vmem:[#allocation9 + $0x140] sm:$0xff]
    %v438 = vld [vmem:[#allocation9 + $0x148] sm:$0xff]
    %v439 = vld [vmem:[#allocation9 + $0x150] sm:$0xff]
    %v440 = vld [vmem:[#allocation9 + $0x158] sm:$0xff]
    %v441 = vld [vmem:[#allocation9 + $0x160] sm:$0xff]
    %v442 = vld [vmem:[#allocation9 + $0x168] sm:$0xff]
    %v443 = vld [vmem:[#allocation9 + $0x170] sm:$0xff]
    %v444 = vld [vmem:[#allocation9 + $0x178] sm:$0xff]
    %445 = vmatprep.subr.mxu0 %v398
    %446 = vmatpush1.msra.mxu0 %v397
    %447 = vmatprep.subr.mxu0 %v401
    %448 = vmatpush1.msra.mxu0 %v400
    %449 = vmatprep.subr.mxu0 %v404
    %450 = vmatpush1.msra.mxu0 %v403
    %451 = vmatprep.subr.mxu0 %v407
    %452 = vmatpush1.msra.mxu0 %v406
    %453 = vmatprep.subr.mxu0 %v410
    %454 = vmatpush1.msra.mxu0 %v409
    %455 = vmatprep.subr.mxu0 %v413
    %456 = vmatpush1.msra.mxu0 %v412
    %457 = vmatprep.subr.mxu0 %v416
    %458 = vmatpush1.msra.mxu0 %v415
    %459 = vmatprep.subr.mxu0 %v419
    %460 = vmatpush1.msra.mxu0 %v418
    %461 = vmatprep.subr.mxu0 %v422
    %462 = vmatpush1.msra.mxu0 %v421
    %463 = vmatprep.subr.mxu0 %v425
    %464 = vmatpush1.msra.mxu0 %v424
    %465 = vmatprep.subr.mxu0 %v428
    %466 = vmatpush1.msra.mxu0 %v427
    %467 = vmatprep.subr.mxu0 %v431
    %468 = vmatpush1.msra.mxu0 %v430
    %469 = vmatprep.subr.mxu0 %v434
    %470 = vmatpush1.msra.mxu0 %v433
    %471 = vmatprep.subr.mxu0 %v437
    %472 = vmatpush1.msra.mxu0 %v436
    %473 = vmatprep.subr.mxu0 %v440
    %474 = vmatpush1.msra.mxu0 %v439
    %475 = vmatprep.subr.mxu0 %v443
    %476 = vmatpush1.msra.mxu0 %v442
    %477 = vmatprep.subr.mxu0 0.0
    %478 = vmatpush1.msra.mxu0 0.0
    %479 = vmatprep.subr.mxu0 0.0
    %480 = vmatpush1.msra.mxu0 0.0
    %481 = vmatprep.subr.mxu0 0.0
    %482 = vmatpush1.msra.mxu0 0.0
    %483 = vmatprep.subr.mxu0 0.0
    %484 = vmatpush1.msra.mxu0 0.0
    %485 = vmatprep.subr.mxu0 0.0
    %486 = vmatpush1.msra.mxu0 0.0
    %487 = vmatprep.subr.mxu0 0.0
    %488 = vmatpush1.msra.mxu0 0.0
    %489 = vmatprep.subr.mxu0 0.0
    %490 = vmatpush1.msra.mxu0 0.0
    %491 = vmatprep.subr.mxu0 0.0
    %492 = vmatpush1.msra.mxu0 0.0
    %493 = vmatprep.subr.mxu0 0.0
    %494 = vmatpush1.msra.mxu0 0.0
    %495 = vmatprep.subr.mxu0 0.0
    %496 = vmatpush1.msra.mxu0 0.0
    %497 = vmatprep.subr.mxu0 0.0
    %498 = vmatpush1.msra.mxu0 0.0
    %499 = vmatprep.subr.mxu0 0.0
    %500 = vmatpush1.msra.mxu0 0.0
    %501 = vmatprep.subr.mxu0 0.0
    %502 = vmatpush1.msra.mxu0 0.0
    %503 = vmatprep.subr.mxu0 0.0
    %504 = vmatpush1.msra.mxu0 0.0
    %505 = vmatprep.subr.mxu0 0.0
    %506 = vmatpush1.msra.mxu0 0.0
    %507 = vmatprep.subr.mxu0 0.0
    %508 = vmatpush1.msra.mxu0 0.0
    %509 = vmatprep.mubr.f32.mxu0 0.0
    %510 = vmatmul.mubr.f32.gmra.mrb[0].mxu0 %v393
    %v511 = vpop.f32.mrb[0].mxu0
    %v512 = vadd.f32 0.0, %v511
    %v513 = vpop.f32.mrb[0].mxu0
    %v514 = vadd.f32 0.0, %v513
    %515 = vdwg.mxu0
    %516 = vmatprep.subr.mxu0 0.0
    %517 = vmatpush1.msra.mxu0 %v399
    %518 = vmatprep.subr.mxu0 0.0
    %519 = vmatpush1.msra.mxu0 %v402
    %520 = vmatprep.subr.mxu0 0.0
    %521 = vmatpush1.msra.mxu0 %v405
    %522 = vmatprep.subr.mxu0 0.0
    %523 = vmatpush1.msra.mxu0 %v408
    %524 = vmatprep.subr.mxu0 0.0
    %525 = vmatpush1.msra.mxu0 %v411
    %526 = vmatprep.subr.mxu0 0.0
    %527 = vmatpush1.msra.mxu0 %v414
    %528 = vmatprep.subr.mxu0 0.0
    %529 = vmatpush1.msra.mxu0 %v417
    %530 = vmatprep.subr.mxu0 0.0
    %531 = vmatpush1.msra.mxu0 %v420
    %532 = vmatprep.subr.mxu0 0.0
    %533 = vmatpush1.msra.mxu0 %v423
    %534 = vmatprep.subr.mxu0 0.0
    %535 = vmatpush1.msra.mxu0 %v426
    %536 = vmatprep.subr.mxu0 0.0
    %537 = vmatpush1.msra.mxu0 %v429
    %538 = vmatprep.subr.mxu0 0.0
    %539 = vmatpush1.msra.mxu0 %v432
    %540 = vmatprep.subr.mxu0 0.0
    %541 = vmatpush1.msra.mxu0 %v435
    %542 = vmatprep.subr.mxu0 0.0
    %543 = vmatpush1.msra.mxu0 %v438
    %544 = vmatprep.subr.mxu0 0.0
    %545 = vmatpush1.msra.mxu0 %v441
    %546 = vmatprep.subr.mxu0 0.0
    %547 = vmatpush1.msra.mxu0 %v444
    %548 = vmatprep.subr.mxu0 0.0
    %549 = vmatpush1.msra.mxu0 0.0
    %550 = vmatprep.subr.mxu0 0.0
    %551 = vmatpush1.msra.mxu0 0.0
    %552 = vmatprep.subr.mxu0 0.0
    %553 = vmatpush1.msra.mxu0 0.0
    %554 = vmatprep.subr.mxu0 0.0
    %555 = vmatpush1.msra.mxu0 0.0
    %556 = vmatprep.subr.mxu0 0.0
    %557 = vmatpush1.msra.mxu0 0.0
    %558 = vmatprep.subr.mxu0 0.0
    %559 = vmatpush1.msra.mxu0 0.0
    %560 = vmatprep.subr.mxu0 0.0
    %561 = vmatpush1.msra.mxu0 0.0
    %562 = vmatprep.subr.mxu0 0.0
    %563 = vmatpush1.msra.mxu0 0.0
    %564 = vmatprep.subr.mxu0 0.0
    %565 = vmatpush1.msra.mxu0 0.0
    %566 = vmatprep.subr.mxu0 0.0
    %567 = vmatpush1.msra.mxu0 0.0
    %568 = vmatprep.subr.mxu0 0.0
    %569 = vmatpush1.msra.mxu0 0.0
    %570 = vmatprep.subr.mxu0 0.0
    %571 = vmatpush1.msra.mxu0 0.0
    %572 = vmatprep.subr.mxu0 0.0
    %573 = vmatpush1.msra.mxu0 0.0
    %574 = vmatprep.subr.mxu0 0.0
    %575 = vmatpush1.msra.mxu0 0.0
    %576 = vmatprep.subr.mxu0 0.0
    %577 = vmatpush1.msra.mxu0 0.0
    %578 = vmatprep.subr.mxu0 0.0
    %579 = vmatpush1.msra.mxu0 0.0
    %580 = vmatprep.mubr.f32.mxu0 0.0
    %581 = vmatmul.mubr.f32.gmra.mrb[0].mxu0 %v393
    %v582 = vpop.f32.mrb[0].mxu0
    %v583 = vadd.f32 0.0, %v582
    %v584 = vpop.f32.mrb[0].mxu0
    %585 = vdwg.mxu0
    %v586 = vadd.f32 %v394, %v512
    %v587 = vxor.u32 %v586, 2147483648
    %v588 = vmul.f32 %v587, 1.442695
    %v589 = vpow.pop %v588
    %v590 = vadd.f32 %v589, 1.0
    %v591 = vrcp.pop %v590
    %v592 = vmul.f32 1.0, %v591
    %v593 = vadd.f32 %v395, %v514
    %v594 = vxor.u32 %v593, 2147483648
    %v595 = vmul.f32 %v594, 1.442695
    %v596 = vpow.pop %v595
    %v597 = vadd.f32 %v596, 1.0
    %v598 = vrcp.pop %v597
    %v599 = vmul.f32 1.0, %v598
    %v601 = vlaneseq
    %v602 = vshrl.u32 %v601, 7
    %v603 = vsub.s32 0, %v602
    %v604 = vrot.slane %v392, %v603
    %v606 = vadd.f32 %v583, %v604
    %v607 = vmul.f32 %v592, %v606
    %v608 = vadd.f32 %v396, %v607
    %v609 = vtanh.pop %v608
    %v610 = vsub.f32 1.0, %v599
    %v611 = vmul.f32 %v610, %v609
    %v612 = vmul.f32 %v599, %v393
    %v613 = vadd.f32 %v611, %v612
    %614 = vst [vmem:[#allocation11] sm:$0xff] %v613
    %v615 = vld [vmem:[#allocation2 + $0x18] sm:$0xff]
    %v616 = vld [vmem:[#allocation2 + $0x20] sm:$0xff]
    %v617 = vld [vmem:[#allocation2 + $0x28] sm:$0xff]
    %v618 = vld [vmem:[#allocation9] sm:$0xff]
    %v619 = vld [vmem:[#allocation9 + $0x8] sm:$0xff]
    %v620 = vld [vmem:[#allocation9 + $0x10] sm:$0xff]
    %v621 = vld [vmem:[#allocation9 + $0x18] sm:$0xff]
    %v622 = vld [vmem:[#allocation9 + $0x20] sm:$0xff]
    %v623 = vld [vmem:[#allocation9 + $0x28] sm:$0xff]
    %v624 = vld [vmem:[#allocation9 + $0x30] sm:$0xff]
    %v625 = vld [vmem:[#allocation9 + $0x38] sm:$0xff]
    %v626 = vld [vmem:[#allocation9 + $0x40] sm:$0xff]
    %v627 = vld [vmem:[#allocation9 + $0x48] sm:$0xff]
    %v628 = vld [vmem:[#allocation9 + $0x50] sm:$0xff]
    %v629 = vld [vmem:[#allocation9 + $0x58] sm:$0xff]
    %v630 = vld [vmem:[#allocation9 + $0x60] sm:$0xff]
    %v631 = vld [vmem:[#allocation9 + $0x68] sm:$0xff]
    %v632 = vld [vmem:[#allocation9 + $0x70] sm:$0xff]
    %v633 = vld [vmem:[#allocation9 + $0x78] sm:$0xff]
    %v634 = vld [vmem:[#allocation9 + $0x80] sm:$0xff]
    %v635 = vld [vmem:[#allocation9 + $0x88] sm:$0xff]
    %v636 = vld [vmem:[#allocation9 + $0x90] sm:$0xff]
    %v637 = vld [vmem:[#allocation9 + $0x98] sm:$0xff]
    %v638 = vld [vmem:[#allocation9 + $0xa0] sm:$0xff]
    %v639 = vld [vmem:[#allocation9 + $0xa8] sm:$0xff]
    %v640 = vld [vmem:[#allocation9 + $0xb0] sm:$0xff]
    %v641 = vld [vmem:[#allocation9 + $0xb8] sm:$0xff]
    %v642 = vld [vmem:[#allocation9 + $0xc0] sm:$0xff]
    %v643 = vld [vmem:[#allocation9 + $0xc8] sm:$0xff]
    %v644 = vld [vmem:[#allocation9 + $0xd0] sm:$0xff]
    %v645 = vld [vmem:[#allocation9 + $0xd8] sm:$0xff]
    %v646 = vld [vmem:[#allocation9 + $0xe0] sm:$0xff]
    %v647 = vld [vmem:[#allocation9 + $0xe8] sm:$0xff]
    %v648 = vld [vmem:[#allocation9 + $0xf0] sm:$0xff]
    %v649 = vld [vmem:[#allocation9 + $0xf8] sm:$0xff]
    %v650 = vld [vmem:[#allocation9 + $0x100] sm:$0xff]
    %v651 = vld [vmem:[#allocation9 + $0x108] sm:$0xff]
    %v652 = vld [vmem:[#allocation9 + $0x110] sm:$0xff]
    %v653 = vld [vmem:[#allocation9 + $0x118] sm:$0xff]
    %v654 = vld [vmem:[#allocation9 + $0x120] sm:$0xff]
    %v655 = vld [vmem:[#allocation9 + $0x128] sm:$0xff]
    %v656 = vld [vmem:[#allocation9 + $0x130] sm:$0xff]
    %v657 = vld [vmem:[#allocation9 + $0x138] sm:$0xff]
    %v658 = vld [vmem:[#allocation9 + $0x140] sm:$0xff]
    %v659 = vld [vmem:[#allocation9 + $0x148] sm:$0xff]
    %v660 = vld [vmem:[#allocation9 + $0x150] sm:$0xff]
    %v661 = vld [vmem:[#allocation9 + $0x158] sm:$0xff]
    %v662 = vld [vmem:[#allocation9 + $0x160] sm:$0xff]
    %v663 = vld [vmem:[#allocation9 + $0x168] sm:$0xff]
    %v664 = vld [vmem:[#allocation9 + $0x170] sm:$0xff]
    %v665 = vld [vmem:[#allocation9 + $0x178] sm:$0xff]
    %666 = vmatprep.subr.mxu0 %v619
    %667 = vmatpush1.msra.mxu0 %v618
    %668 = vmatprep.subr.mxu0 %v622
    %669 = vmatpush1.msra.mxu0 %v621
    %670 = vmatprep.subr.mxu0 %v625
    %671 = vmatpush1.msra.mxu0 %v624
    %672 = vmatprep.subr.mxu0 %v628
    %673 = vmatpush1.msra.mxu0 %v627
    %674 = vmatprep.subr.mxu0 %v631
    %675 = vmatpush1.msra.mxu0 %v630
    %676 = vmatprep.subr.mxu0 %v634
    %677 = vmatpush1.msra.mxu0 %v633
    %678 = vmatprep.subr.mxu0 %v637
    %679 = vmatpush1.msra.mxu0 %v636
    %680 = vmatprep.subr.mxu0 %v640
    %681 = vmatpush1.msra.mxu0 %v639
    %682 = vmatprep.subr.mxu0 %v643
    %683 = vmatpush1.msra.mxu0 %v642
    %684 = vmatprep.subr.mxu0 %v646
    %685 = vmatpush1.msra.mxu0 %v645
    %686 = vmatprep.subr.mxu0 %v649
    %687 = vmatpush1.msra.mxu0 %v648
    %688 = vmatprep.subr.mxu0 %v652
    %689 = vmatpush1.msra.mxu0 %v651
    %690 = vmatprep.subr.mxu0 %v655
    %691 = vmatpush1.msra.mxu0 %v654
    %692 = vmatprep.subr.mxu0 %v658
    %693 = vmatpush1.msra.mxu0 %v657
    %694 = vmatprep.subr.mxu0 %v661
    %695 = vmatpush1.msra.mxu0 %v660
    %696 = vmatprep.subr.mxu0 %v664
    %697 = vmatpush1.msra.mxu0 %v663
    %698 = vmatprep.subr.mxu0 0.0
    %699 = vmatpush1.msra.mxu0 0.0
    %700 = vmatprep.subr.mxu0 0.0
    %701 = vmatpush1.msra.mxu0 0.0
    %702 = vmatprep.subr.mxu0 0.0
    %703 = vmatpush1.msra.mxu0 0.0
    %704 = vmatprep.subr.mxu0 0.0
    %705 = vmatpush1.msra.mxu0 0.0
    %706 = vmatprep.subr.mxu0 0.0
    %707 = vmatpush1.msra.mxu0 0.0
    %708 = vmatprep.subr.mxu0 0.0
    %709 = vmatpush1.msra.mxu0 0.0
    %710 = vmatprep.subr.mxu0 0.0
    %711 = vmatpush1.msra.mxu0 0.0
    %712 = vmatprep.subr.mxu0 0.0
    %713 = vmatpush1.msra.mxu0 0.0
    %714 = vmatprep.subr.mxu0 0.0
    %715 = vmatpush1.msra.mxu0 0.0
    %716 = vmatprep.subr.mxu0 0.0
    %717 = vmatpush1.msra.mxu0 0.0
    %718 = vmatprep.subr.mxu0 0.0
    %719 = vmatpush1.msra.mxu0 0.0
    %720 = vmatprep.subr.mxu0 0.0
    %721 = vmatpush1.msra.mxu0 0.0
    %722 = vmatprep.subr.mxu0 0.0
    %723 = vmatpush1.msra.mxu0 0.0
    %724 = vmatprep.subr.mxu0 0.0
    %725 = vmatpush1.msra.mxu0 0.0
    %726 = vmatprep.subr.mxu0 0.0
    %727 = vmatpush1.msra.mxu0 0.0
    %728 = vmatprep.subr.mxu0 0.0
    %729 = vmatpush1.msra.mxu0 0.0
    %730 = vmatprep.mubr.f32.mxu0 0.0
    %731 = vmatmul.mubr.f32.gmra.mrb[0].mxu0 %v613
    %v732 = vpop.f32.mrb[0].mxu0
    %v733 = vadd.f32 0.0, %v732
    %v734 = vpop.f32.mrb[0].mxu0
    %v735 = vadd.f32 0.0, %v734
    %736 = vdwg.mxu0
    %737 = vmatprep.subr.mxu0 0.0
    %738 = vmatpush1.msra.mxu0 %v620
    %739 = vmatprep.subr.mxu0 0.0
    %740 = vmatpush1.msra.mxu0 %v623
    %741 = vmatprep.subr.mxu0 0.0
    %742 = vmatpush1.msra.mxu0 %v626
    %743 = vmatprep.subr.mxu0 0.0
    %744 = vmatpush1.msra.mxu0 %v629
    %745 = vmatprep.subr.mxu0 0.0
    %746 = vmatpush1.msra.mxu0 %v632
    %747 = vmatprep.subr.mxu0 0.0
    %748 = vmatpush1.msra.mxu0 %v635
    %749 = vmatprep.subr.mxu0 0.0
    %750 = vmatpush1.msra.mxu0 %v638
    %751 = vmatprep.subr.mxu0 0.0
    %752 = vmatpush1.msra.mxu0 %v641
    %753 = vmatprep.subr.mxu0 0.0
    %754 = vmatpush1.msra.mxu0 %v644
    %755 = vmatprep.subr.mxu0 0.0
    %756 = vmatpush1.msra.mxu0 %v647
    %757 = vmatprep.subr.mxu0 0.0
    %758 = vmatpush1.msra.mxu0 %v650
    %759 = vmatprep.subr.mxu0 0.0
    %760 = vmatpush1.msra.mxu0 %v653
    %761 = vmatprep.subr.mxu0 0.0
    %762 = vmatpush1.msra.mxu0 %v656
    %763 = vmatprep.subr.mxu0 0.0
    %764 = vmatpush1.msra.mxu0 %v659
    %765 = vmatprep.subr.mxu0 0.0
    %766 = vmatpush1.msra.mxu0 %v662
    %767 = vmatprep.subr.mxu0 0.0
    %768 = vmatpush1.msra.mxu0 %v665
    %769 = vmatprep.subr.mxu0 0.0
    %770 = vmatpush1.msra.mxu0 0.0
    %771 = vmatprep.subr.mxu0 0.0
    %772 = vmatpush1.msra.mxu0 0.0
    %773 = vmatprep.subr.mxu0 0.0
    %774 = vmatpush1.msra.mxu0 0.0
    %775 = vmatprep.subr.mxu0 0.0
    %776 = vmatpush1.msra.mxu0 0.0
    %777 = vmatprep.subr.mxu0 0.0
    %778 = vmatpush1.msra.mxu0 0.0
    %779 = vmatprep.subr.mxu0 0.0
    %780 = vmatpush1.msra.mxu0 0.0
    %781 = vmatprep.subr.mxu0 0.0
    %782 = vmatpush1.msra.mxu0 0.0
    %783 = vmatprep.subr.mxu0 0.0
    %784 = vmatpush1.msra.mxu0 0.0
    %785 = vmatprep.subr.mxu0 0.0
    %786 = vmatpush1.msra.mxu0 0.0
    %787 = vmatprep.subr.mxu0 0.0
    %788 = vmatpush1.msra.mxu0 0.0
    %789 = vmatprep.subr.mxu0 0.0
    %790 = vmatpush1.msra.mxu0 0.0
    %791 = vmatprep.subr.mxu0 0.0
    %792 = vmatpush1.msra.mxu0 0.0
    %793 = vmatprep.subr.mxu0 0.0
    %794 = vmatpush1.msra.mxu0 0.0
    %795 = vmatprep.subr.mxu0 0.0
    %796 = vmatpush1.msra.mxu0 0.0
    %797 = vmatprep.subr.mxu0 0.0
    %798 = vmatpush1.msra.mxu0 0.0
    %799 = vmatprep.subr.mxu0 0.0
    %800 = vmatpush1.msra.mxu0 0.0
    %801 = vmatprep.mubr.f32.mxu0 0.0
    %802 = vmatmul.mubr.f32.gmra.mrb[0].mxu0 %v613
    %v803 = vpop.f32.mrb[0].mxu0
    %v804 = vadd.f32 0.0, %v803
    %v805 = vpop.f32.mrb[0].mxu0
    %806 = vdwg.mxu0
    %v807 = vadd.f32 %v615, %v733
    %v808 = vxor.u32 %v807, 2147483648
    %v809 = vmul.f32 %v808, 1.442695
    %v810 = vpow.pop %v809
    %v811 = vadd.f32 %v810, 1.0
    %v812 = vrcp.pop %v811
    %v813 = vmul.f32 1.0, %v812
    %v814 = vadd.f32 %v616, %v735
    %v815 = vxor.u32 %v814, 2147483648
    %v816 = vmul.f32 %v815, 1.442695
    %v817 = vpow.pop %v816
    %v818 = vadd.f32 %v817, 1.0
    %v819 = vrcp.pop %v818
    %v820 = vmul.f32 1.0, %v819
    %v821 = vadd.f32 %v804, %v604
    %v822 = vmul.f32 %v813, %v821
    %v823 = vadd.f32 %v617, %v822
    %v824 = vtanh.pop %v823
    %v825 = vsub.f32 1.0, %v820
    %v826 = vmul.f32 %v825, %v824
    %v827 = vmul.f32 %v820, %v613
    %v828 = vadd.f32 %v826, %v827
    %829 = vst [vmem:[#allocation11 + $0x8] sm:$0xff] %v828
    %v830 = vld [vmem:[#allocation2 + $0x30] sm:$0xff]
    %v831 = vld [vmem:[#allocation2 + $0x38] sm:$0xff]
    %v832 = vld [vmem:[#allocation2 + $0x40] sm:$0xff]
    %v833 = vld [vmem:[#allocation9] sm:$0xff]
    %v834 = vld [vmem:[#allocation9 + $0x8] sm:$0xff]
    %v835 = vld [vmem:[#allocation9 + $0x10] sm:$0xff]
    %v836 = vld [vmem:[#allocation9 + $0x18] sm:$0xff]
    %v837 = vld [vmem:[#allocation9 + $0x20] sm:$0xff]
    %v838 = vld [vmem:[#allocation9 + $0x28] sm:$0xff]
    %v839 = vld [vmem:[#allocation9 + $0x30] sm:$0xff]
    %v840 = vld [vmem:[#allocation9 + $0x38] sm:$0xff]
    %v841 = vld [vmem:[#allocation9 + $0x40] sm:$0xff]
    %v842 = vld [vmem:[#allocation9 + $0x48] sm:$0xff]
    %v843 = vld [vmem:[#allocation9 + $0x50] sm:$0xff]
    %v844 = vld [vmem:[#allocation9 + $0x58] sm:$0xff]
    %v845 = vld [vmem:[#allocation9 + $0x60] sm:$0xff]
    %v846 = vld [vmem:[#allocation9 + $0x68] sm:$0xff]
    %v847 = vld [vmem:[#allocation9 + $0x70] sm:$0xff]
    %v848 = vld [vmem:[#allocation9 + $0x78] sm:$0xff]
    %v849 = vld [vmem:[#allocation9 + $0x80] sm:$0xff]
    %v850 = vld [vmem:[#allocation9 + $0x88] sm:$0xff]
    %v851 = vld [vmem:[#allocation9 + $0x90] sm:$0xff]
    %v852 = vld [vmem:[#allocation9 + $0x98] sm:$0xff]
    %v853 = vld [vmem:[#allocation9 + $0xa0] sm:$0xff]
    %v854 = vld [vmem:[#allocation9 + $0xa8] sm:$0xff]
    %v855 = vld [vmem:[#allocation9 + $0xb0] sm:$0xff]
    %v856 = vld [vmem:[#allocation9 + $0xb8] sm:$0xff]
    %v857 = vld [vmem:[#allocation9 + $0xc0] sm:$0xff]
    %v858 = vld [vmem:[#allocation9 + $0xc8] sm:$0xff]
    %v859 = vld [vmem:[#allocation9 + $0xd0] sm:$0xff]
    %v860 = vld [vmem:[#allocation9 + $0xd8] sm:$0xff]
    %v861 = vld [vmem:[#allocation9 + $0xe0] sm:$0xff]
    %v862 = vld [vmem:[#allocation9 + $0xe8] sm:$0xff]
    %v863 = vld [vmem:[#allocation9 + $0xf0] sm:$0xff]
    %v864 = vld [vmem:[#allocation9 + $0xf8] sm:$0xff]
    %v865 = vld [vmem:[#allocation9 + $0x100] sm:$0xff]
    %v866 = vld [vmem:[#allocation9 + $0x108] sm:$0xff]
    %v867 = vld [vmem:[#allocation9 + $0x110] sm:$0xff]
    %v868 = vld [vmem:[#allocation9 + $0x118] sm:$0xff]
    %v869 = vld [vmem:[#allocation9 + $0x120] sm:$0xff]
    %v870 = vld [vmem:[#allocation9 + $0x128] sm:$0xff]
    %v871 = vld [vmem:[#allocation9 + $0x130] sm:$0xff]
    %v872 = vld [vmem:[#allocation9 + $0x138] sm:$0xff]
    %v873 = vld [vmem:[#allocation9 + $0x140] sm:$0xff]
    %v874 = vld [vmem:[#allocation9 + $0x148] sm:$0xff]
    %v875 = vld [vmem:[#allocation9 + $0x150] sm:$0xff]
    %v876 = vld [vmem:[#allocation9 + $0x158] sm:$0xff]
    %v877 = vld [vmem:[#allocation9 + $0x160] sm:$0xff]
    %v878 = vld [vmem:[#allocation9 + $0x168] sm:$0xff]
    %v879 = vld [vmem:[#allocation9 + $0x170] sm:$0xff]
    %v880 = vld [vmem:[#allocation9 + $0x178] sm:$0xff]
    %881 = vmatprep.subr.mxu0 %v834
    %882 = vmatpush1.msra.mxu0 %v833
    %883 = vmatprep.subr.mxu0 %v837
    %884 = vmatpush1.msra.mxu0 %v836
    %885 = vmatprep.subr.mxu0 %v840
    %886 = vmatpush1.msra.mxu0 %v839
    %887 = vmatprep.subr.mxu0 %v843
    %888 = vmatpush1.msra.mxu0 %v842
    %889 = vmatprep.subr.mxu0 %v846
    %890 = vmatpush1.msra.mxu0 %v845
    %891 = vmatprep.subr.mxu0 %v849
    %892 = vmatpush1.msra.mxu0 %v848
    %893 = vmatprep.subr.mxu0 %v852
    %894 = vmatpush1.msra.mxu0 %v851
    %895 = vmatprep.subr.mxu0 %v855
    %896 = vmatpush1.msra.mxu0 %v854
    %897 = vmatprep.subr.mxu0 %v858
    %898 = vmatpush1.msra.mxu0 %v857
    %899 = vmatprep.subr.mxu0 %v861
    %900 = vmatpush1.msra.mxu0 %v860
    %901 = vmatprep.subr.mxu0 %v864
    %902 = vmatpush1.msra.mxu0 %v863
    %903 = vmatprep.subr.mxu0 %v867
    %904 = vmatpush1.msra.mxu0 %v866
    %905 = vmatprep.subr.mxu0 %v870
    %906 = vmatpush1.msra.mxu0 %v869
    %907 = vmatprep.subr.mxu0 %v873
    %908 = vmatpush1.msra.mxu0 %v872
    %909 = vmatprep.subr.mxu0 %v876
    %910 = vmatpush1.msra.mxu0 %v875
    %911 = vmatprep.subr.mxu0 %v879
    %912 = vmatpush1.msra.mxu0 %v878
    %913 = vmatprep.subr.mxu0 0.0
    %914 = vmatpush1.msra.mxu0 0.0
    %915 = vmatprep.subr.mxu0 0.0
    %916 = vmatpush1.msra.mxu0 0.0
    %917 = vmatprep.subr.mxu0 0.0
    %918 = vmatpush1.msra.mxu0 0.0
    %919 = vmatprep.subr.mxu0 0.0
    %920 = vmatpush1.msra.mxu0 0.0
    %921 = vmatprep.subr.mxu0 0.0
    %922 = vmatpush1.msra.mxu0 0.0
    %923 = vmatprep.subr.mxu0 0.0
    %924 = vmatpush1.msra.mxu0 0.0
    %925 = vmatprep.subr.mxu0 0.0
    %926 = vmatpush1.msra.mxu0 0.0
    %927 = vmatprep.subr.mxu0 0.0
    %928 = vmatpush1.msra.mxu0 0.0
    %929 = vmatprep.subr.mxu0 0.0
    %930 = vmatpush1.msra.mxu0 0.0
    %931 = vmatprep.subr.mxu0 0.0
    %932 = vmatpush1.msra.mxu0 0.0
    %933 = vmatprep.subr.mxu0 0.0
    %934 = vmatpush1.msra.mxu0 0.0
    %935 = vmatprep.subr.mxu0 0.0
    %936 = vmatpush1.msra.mxu0 0.0
    %937 = vmatprep.subr.mxu0 0.0
    %938 = vmatpush1.msra.mxu0 0.0
    %939 = vmatprep.subr.mxu0 0.0
    %940 = vmatpush1.msra.mxu0 0.0
    %941 = vmatprep.subr.mxu0 0.0
    %942 = vmatpush1.msra.mxu0 0.0
    %943 = vmatprep.subr.mxu0 0.0
    %944 = vmatpush1.msra.mxu0 0.0
    %945 = vmatprep.mubr.f32.mxu0 0.0
    %946 = vmatmul.mubr.f32.gmra.mrb[0].mxu0 %v828
    %v947 = vpop.f32.mrb[0].mxu0
    %v948 = vadd.f32 0.0, %v947
    %v949 = vpop.f32.mrb[0].mxu0
    %v950 = vadd.f32 0.0, %v949
    %951 = vdwg.mxu0
    %952 = vmatprep.subr.mxu0 0.0
    %953 = vmatpush1.msra.mxu0 %v835
    %954 = vmatprep.subr.mxu0 0.0
    %955 = vmatpush1.msra.mxu0 %v838
    %956 = vmatprep.subr.mxu0 0.0
    %957 = vmatpush1.msra.mxu0 %v841
    %958 = vmatprep.subr.mxu0 0.0
    %959 = vmatpush1.msra.mxu0 %v844
    %960 = vmatprep.subr.mxu0 0.0
    %961 = vmatpush1.msra.mxu0 %v847
    %962 = vmatprep.subr.mxu0 0.0
    %963 = vmatpush1.msra.mxu0 %v850
    %964 = vmatprep.subr.mxu0 0.0
    %965 = vmatpush1.msra.mxu0 %v853
    %966 = vmatprep.subr.mxu0 0.0
    %967 = vmatpush1.msra.mxu0 %v856
    %968 = vmatprep.subr.mxu0 0.0
    %969 = vmatpush1.msra.mxu0 %v859
    %970 = vmatprep.subr.mxu0 0.0
    %971 = vmatpush1.msra.mxu0 %v862
    %972 = vmatprep.subr.mxu0 0.0
    %973 = vmatpush1.msra.mxu0 %v865
    %974 = vmatprep.subr.mxu0 0.0
    %975 = vmatpush1.msra.mxu0 %v868
    %976 = vmatprep.subr.mxu0 0.0
    %977 = vmatpush1.msra.mxu0 %v871
    %978 = vmatprep.subr.mxu0 0.0
    %979 = vmatpush1.msra.mxu0 %v874
    %980 = vmatprep.subr.mxu0 0.0
    %981 = vmatpush1.msra.mxu0 %v877
    %982 = vmatprep.subr.mxu0 0.0
    %983 = vmatpush1.msra.mxu0 %v880
    %984 = vmatprep.subr.mxu0 0.0
    %985 = vmatpush1.msra.mxu0 0.0
    %986 = vmatprep.subr.mxu0 0.0
    %987 = vmatpush1.msra.mxu0 0.0
    %988 = vmatprep.subr.mxu0 0.0
    %989 = vmatpush1.msra.mxu0 0.0
    %990 = vmatprep.subr.mxu0 0.0
    %991 = vmatpush1.msra.mxu0 0.0
    %992 = vmatprep.subr.mxu0 0.0
    %993 = vmatpush1.msra.mxu0 0.0
    %994 = vmatprep.subr.mxu0 0.0
    %995 = vmatpush1.msra.mxu0 0.0
    %996 = vmatprep.subr.mxu0 0.0
    %997 = vmatpush1.msra.mxu0 0.0
    %998 = vmatprep.subr.mxu0 0.0
    %999 = vmatpush1.msra.mxu0 0.0
    %1000 = vmatprep.subr.mxu0 0.0
    %1001 = vmatpush1.msra.mxu0 0.0
    %1002 = vmatprep.subr.mxu0 0.0
    %1003 = vmatpush1.msra.mxu0 0.0
    %1004 = vmatprep.subr.mxu0 0.0
    %1005 = vmatpush1.msra.mxu0 0.0
    %1006 = vmatprep.subr.mxu0 0.0
    %1007 = vmatpush1.msra.mxu0 0.0
    %1008 = vmatprep.subr.mxu0 0.0
    %1009 = vmatpush1.msra.mxu0 0.0
    %1010 = vmatprep.subr.mxu0 0.0
    %1011 = vmatpush1.msra.mxu0 0.0
    %1012 = vmatprep.subr.mxu0 0.0
    %1013 = vmatpush1.msra.mxu0 0.0
    %1014 = vmatprep.subr.mxu0 0.0
    %1015 = vmatpush1.msra.mxu0 0.0
    %1016 = vmatprep.mubr.f32.mxu0 0.0
    %1017 = vmatmul.mubr.f32.gmra.mrb[0].mxu0 %v828
    %v1018 = vpop.f32.mrb[0].mxu0
    %v1019 = vadd.f32 0.0, %v1018
    %v1020 = vpop.f32.mrb[0].mxu0
    %1021 = vdwg.mxu0
    %v1022 = vadd.f32 %v830, %v948
    %v1023 = vxor.u32 %v1022, 2147483648
    %v1024 = vmul.f32 %v1023, 1.442695
    %v1025 = vpow.pop %v1024
    %v1026 = vadd.f32 %v1025, 1.0
    %v1027 = vrcp.pop %v1026
    %v1028 = vmul.f32 1.0, %v1027
    %v1029 = vadd.f32 %v831, %v950
    %v1030 = vxor.u32 %v1029, 2147483648
    %v1031 = vmul.f32 %v1030, 1.442695
    %v1032 = vpow.pop %v1031
    %v1033 = vadd.f32 %v1032, 1.0
    %v1034 = vrcp.pop %v1033
    %v1035 = vmul.f32 1.0, %v1034
    %v1036 = vadd.f32 %v1019, %v604
    %v1037 = vmul.f32 %v1028, %v1036
    %v1038 = vadd.f32 %v832, %v1037
    %v1039 = vtanh.pop %v1038
    %v1040 = vsub.f32 1.0, %v1035
    %v1041 = vmul.f32 %v1040, %v1039
    %v1042 = vmul.f32 %v1035, %v828
    %v1043 = vadd.f32 %v1041, %v1042
    %1044 = vst [vmem:[#allocation11 + $0x10] sm:$0xff] %v1043
    %v1045 = vld [vmem:[#allocation2 + $0x48] sm:$0xff]
    %v1046 = vld [vmem:[#allocation2 + $0x50] sm:$0xff]
    %v1047 = vld [vmem:[#allocation2 + $0x58] sm:$0xff]
    %v1048 = vld [vmem:[#allocation9] sm:$0xff]
    %v1049 = vld [vmem:[#allocation9 + $0x8] sm:$0xff]
    %v1050 = vld [vmem:[#allocation9 + $0x10] sm:$0xff]
    %v1051 = vld [vmem:[#allocation9 + $0x18] sm:$0xff]
    %v1052 = vld [vmem:[#allocation9 + $0x20] sm:$0xff]
    %v1053 = vld [vmem:[#allocation9 + $0x28] sm:$0xff]
    %v1054 = vld [vmem:[#allocation9 + $0x30] sm:$0xff]
    %v1055 = vld [vmem:[#allocation9 + $0x38] sm:$0xff]
    %v1056 = vld [vmem:[#allocation9 + $0x40] sm:$0xff]
    %v1057 = vld [vmem:[#allocation9 + $0x48] sm:$0xff]
    %v1058 = vld [vmem:[#allocation9 + $0x50] sm:$0xff]
    %v1059 = vld [vmem:[#allocation9 + $0x58] sm:$0xff]
    %v1060 = vld [vmem:[#allocation9 + $0x60] sm:$0xff]
    %v1061 = vld [vmem:[#allocation9 + $0x68] sm:$0xff]
    %v1062 = vld [vmem:[#allocation9 + $0x70] sm:$0xff]
    %v1063 = vld [vmem:[#allocation9 + $0x78] sm:$0xff]
    %v1064 = vld [vmem:[#allocation9 + $0x80] sm:$0xff]
    %v1065 = vld [vmem:[#allocation9 + $0x88] sm:$0xff]
    %v1066 = vld [vmem:[#allocation9 + $0x90] sm:$0xff]
    %v1067 = vld [vmem:[#allocation9 + $0x98] sm:$0xff]
    %v1068 = vld [vmem:[#allocation9 + $0xa0] sm:$0xff]
    %v1069 = vld [vmem:[#allocation9 + $0xa8] sm:$0xff]
    %v1070 = vld [vmem:[#allocation9 + $0xb0] sm:$0xff]
    %v1071 = vld [vmem:[#allocation9 + $0xb8] sm:$0xff]
    %v1072 = vld [vmem:[#allocation9 + $0xc0] sm:$0xff]
    %v1073 = vld [vmem:[#allocation9 + $0xc8] sm:$0xff]
    %v1074 = vld [vmem:[#allocation9 + $0xd0] sm:$0xff]
    %v1075 = vld [vmem:[#allocation9 + $0xd8] sm:$0xff]
    %v1076 = vld [vmem:[#allocation9 + $0xe0] sm:$0xff]
    %v1077 = vld [vmem:[#allocation9 + $0xe8] sm:$0xff]
    %v1078 = vld [vmem:[#allocation9 + $0xf0] sm:$0xff]
    %v1079 = vld [vmem:[#allocation9 + $0xf8] sm:$0xff]
    %v1080 = vld [vmem:[#allocation9 + $0x100] sm:$0xff]
    %v1081 = vld [vmem:[#allocation9 + $0x108] sm:$0xff]
    %v1082 = vld [vmem:[#allocation9 + $0x110] sm:$0xff]
    %v1083 = vld [vmem:[#allocation9 + $0x118] sm:$0xff]
    %v1084 = vld [vmem:[#allocation9 + $0x120] sm:$0xff]
    %v1085 = vld [vmem:[#allocation9 + $0x128] sm:$0xff]
    %v1086 = vld [vmem:[#allocation9 + $0x130] sm:$0xff]
    %v1087 = vld [vmem:[#allocation9 + $0x138] sm:$0xff]
    %v1088 = vld [vmem:[#allocation9 + $0x140] sm:$0xff]
    %v1089 = vld [vmem:[#allocation9 + $0x148] sm:$0xff]
    %v1090 = vld [vmem:[#allocation9 + $0x150] sm:$0xff]
    %v1091 = vld [vmem:[#allocation9 + $0x158] sm:$0xff]
    %v1092 = vld [vmem:[#allocation9 + $0x160] sm:$0xff]
    %v1093 = vld [vmem:[#allocation9 + $0x168] sm:$0xff]
    %v1094 = vld [vmem:[#allocation9 + $0x170] sm:$0xff]
    %v1095 = vld [vmem:[#allocation9 + $0x178] sm:$0xff]
    %1096 = vmatprep.subr.mxu0 %v1049
    %1097 = vmatpush1.msra.mxu0 %v1048
    %1098 = vmatprep.subr.mxu0 %v1052
    %1099 = vmatpush1.msra.mxu0 %v1051
    %1100 = vmatprep.subr.mxu0 %v1055
    %1101 = vmatpush1.msra.mxu0 %v1054
    %1102 = vmatprep.subr.mxu0 %v1058
    %1103 = vmatpush1.msra.mxu0 %v1057
    %1104 = vmatprep.subr.mxu0 %v1061
    %1105 = vmatpush1.msra.mxu0 %v1060
    %1106 = vmatprep.subr.mxu0 %v1064
    %1107 = vmatpush1.msra.mxu0 %v1063
    %1108 = vmatprep.subr.mxu0 %v1067
    %1109 = vmatpush1.msra.mxu0 %v1066
    %1110 = vmatprep.subr.mxu0 %v1070
    %1111 = vmatpush1.msra.mxu0 %v1069
    %1112 = vmatprep.subr.mxu0 %v1073
    %1113 = vmatpush1.msra.mxu0 %v1072
    %1114 = vmatprep.subr.mxu0 %v1076
    %1115 = vmatpush1.msra.mxu0 %v1075
    %1116 = vmatprep.subr.mxu0 %v1079
    %1117 = vmatpush1.msra.mxu0 %v1078
    %1118 = vmatprep.subr.mxu0 %v1082
    %1119 = vmatpush1.msra.mxu0 %v1081
    %1120 = vmatprep.subr.mxu0 %v1085
    %1121 = vmatpush1.msra.mxu0 %v1084
    %1122 = vmatprep.subr.mxu0 %v1088
    %1123 = vmatpush1.msra.mxu0 %v1087
    %1124 = vmatprep.subr.mxu0 %v1091
    %1125 = vmatpush1.msra.mxu0 %v1090
    %1126 = vmatprep.subr.mxu0 %v1094
    %1127 = vmatpush1.msra.mxu0 %v1093
    %1128 = vmatprep.subr.mxu0 0.0
    %1129 = vmatpush1.msra.mxu0 0.0
    %1130 = vmatprep.subr.mxu0 0.0
    %1131 = vmatpush1.msra.mxu0 0.0
    %1132 = vmatprep.subr.mxu0 0.0
    %1133 = vmatpush1.msra.mxu0 0.0
    %1134 = vmatprep.subr.mxu0 0.0
    %1135 = vmatpush1.msra.mxu0 0.0
    %1136 = vmatprep.subr.mxu0 0.0
    %1137 = vmatpush1.msra.mxu0 0.0
    %1138 = vmatprep.subr.mxu0 0.0
    %1139 = vmatpush1.msra.mxu0 0.0
    %1140 = vmatprep.subr.mxu0 0.0
    %1141 = vmatpush1.msra.mxu0 0.0
    %1142 = vmatprep.subr.mxu0 0.0
    %1143 = vmatpush1.msra.mxu0 0.0
    %1144 = vmatprep.subr.mxu0 0.0
    %1145 = vmatpush1.msra.mxu0 0.0
    %1146 = vmatprep.subr.mxu0 0.0
    %1147 = vmatpush1.msra.mxu0 0.0
    %1148 = vmatprep.subr.mxu0 0.0
    %1149 = vmatpush1.msra.mxu0 0.0
    %1150 = vmatprep.subr.mxu0 0.0
    %1151 = vmatpush1.msra.mxu0 0.0
    %1152 = vmatprep.subr.mxu0 0.0
    %1153 = vmatpush1.msra.mxu0 0.0
    %1154 = vmatprep.subr.mxu0 0.0
    %1155 = vmatpush1.msra.mxu0 0.0
    %1156 = vmatprep.subr.mxu0 0.0
    %1157 = vmatpush1.msra.mxu0 0.0
    %1158 = vmatprep.subr.mxu0 0.0
    %1159 = vmatpush1.msra.mxu0 0.0
    %1160 = vmatprep.mubr.f32.mxu0 0.0
    %1161 = vmatmul.mubr.f32.gmra.mrb[0].mxu0 %v1043
    %v1162 = vpop.f32.mrb[0].mxu0
    %v1163 = vadd.f32 0.0, %v1162
    %v1164 = vpop.f32.mrb[0].mxu0
    %v1165 = vadd.f32 0.0, %v1164
    %1166 = vdwg.mxu0
    %1167 = vmatprep.subr.mxu0 0.0
    %1168 = vmatpush1.msra.mxu0 %v1050
    %1169 = vmatprep.subr.mxu0 0.0
    %1170 = vmatpush1.msra.mxu0 %v1053
    %1171 = vmatprep.subr.mxu0 0.0
    %1172 = vmatpush1.msra.mxu0 %v1056
    %1173 = vmatprep.subr.mxu0 0.0
    %1174 = vmatpush1.msra.mxu0 %v1059
    %1175 = vmatprep.subr.mxu0 0.0
    %1176 = vmatpush1.msra.mxu0 %v1062
    %1177 = vmatprep.subr.mxu0 0.0
    %1178 = vmatpush1.msra.mxu0 %v1065
    %1179 = vmatprep.subr.mxu0 0.0
    %1180 = vmatpush1.msra.mxu0 %v1068
    %1181 = vmatprep.subr.mxu0 0.0
    %1182 = vmatpush1.msra.mxu0 %v1071
    %1183 = vmatprep.subr.mxu0 0.0
    %1184 = vmatpush1.msra.mxu0 %v1074
    %1185 = vmatprep.subr.mxu0 0.0
    %1186 = vmatpush1.msra.mxu0 %v1077
    %1187 = vmatprep.subr.mxu0 0.0
    %1188 = vmatpush1.msra.mxu0 %v1080
    %1189 = vmatprep.subr.mxu0 0.0
    %1190 = vmatpush1.msra.mxu0 %v1083
    %1191 = vmatprep.subr.mxu0 0.0
    %1192 = vmatpush1.msra.mxu0 %v1086
    %1193 = vmatprep.subr.mxu0 0.0
    %1194 = vmatpush1.msra.mxu0 %v1089
    %1195 = vmatprep.subr.mxu0 0.0
    %1196 = vmatpush1.msra.mxu0 %v1092
    %1197 = vmatprep.subr.mxu0 0.0
    %1198 = vmatpush1.msra.mxu0 %v1095
    %1199 = vmatprep.subr.mxu0 0.0
    %1200 = vmatpush1.msra.mxu0 0.0
    %1201 = vmatprep.subr.mxu0 0.0
    %1202 = vmatpush1.msra.mxu0 0.0
    %1203 = vmatprep.subr.mxu0 0.0
    %1204 = vmatpush1.msra.mxu0 0.0
    %1205 = vmatprep.subr.mxu0 0.0
    %1206 = vmatpush1.msra.mxu0 0.0
    %1207 = vmatprep.subr.mxu0 0.0
    %1208 = vmatpush1.msra.mxu0 0.0
    %1209 = vmatprep.subr.mxu0 0.0
    %1210 = vmatpush1.msra.mxu0 0.0
    %1211 = vmatprep.subr.mxu0 0.0
    %1212 = vmatpush1.msra.mxu0 0.0
    %1213 = vmatprep.subr.mxu0 0.0
    %1214 = vmatpush1.msra.mxu0 0.0
    %1215 = vmatprep.subr.mxu0 0.0
    %1216 = vmatpush1.msra.mxu0 0.0
    %1217 = vmatprep.subr.mxu0 0.0
    %1218 = vmatpush1.msra.mxu0 0.0
    %1219 = vmatprep.subr.mxu0 0.0
    %1220 = vmatpush1.msra.mxu0 0.0
    %1221 = vmatprep.subr.mxu0 0.0
    %1222 = vmatpush1.msra.mxu0 0.0
    %1223 = vmatprep.subr.mxu0 0.0
    %1224 = vmatpush1.msra.mxu0 0.0
    %1225 = vmatprep.subr.mxu0 0.0
    %1226 = vmatpush1.msra.mxu0 0.0
    %1227 = vmatprep.subr.mxu0 0.0
    %1228 = vmatpush1.msra.mxu0 0.0
    %1229 = vmatprep.subr.mxu0 0.0
    %1230 = vmatpush1.msra.mxu0 0.0
    %1231 = vmatprep.mubr.f32.mxu0 0.0
    %1232 = vmatmul.mubr.f32.gmra.mrb[0].mxu0 %v1043
    %v1233 = vpop.f32.mrb[0].mxu0
    %v1234 = vadd.f32 0.0, %v1233
    %v1235 = vpop.f32.mrb[0].mxu0
    %1236 = vdwg.mxu0
    %v1237 = vadd.f32 %v1045, %v1163
    %v1238 = vxor.u32 %v1237, 2147483648
    %v1239 = vmul.f32 %v1238, 1.442695
    %v1240 = vpow.pop %v1239
    %v1241 = vadd.f32 %v1240, 1.0
    %v1242 = vrcp.pop %v1241
    %v1243 = vmul.f32 1.0, %v1242
    %v1244 = vadd.f32 %v1046, %v1165
    %v1245 = vxor.u32 %v1244, 2147483648
    %v1246 = vmul.f32 %v1245, 1.442695
    %v1247 = vpow.pop %v1246
    %v1248 = vadd.f32 %v1247, 1.0
    %v1249 = vrcp.pop %v1248
    %v1250 = vmul.f32 1.0, %v1249
    %v1251 = vadd.f32 %v1234, %v604
    %v1252 = vmul.f32 %v1243, %v1251
    %v1253 = vadd.f32 %v1047, %v1252
    %v1254 = vtanh.pop %v1253
    %v1255 = vsub.f32 1.0, %v1250
    %v1256 = vmul.f32 %v1255, %v1254
    %v1257 = vmul.f32 %v1250, %v1043
    %v1258 = vadd.f32 %v1256, %v1257
    %1259 = vst [vmem:[#allocation11 + $0x18] sm:$0xff] %v1258
    %v1260 = vld [vmem:[#allocation2 + $0x60] sm:$0xff]
    %v1261 = vld [vmem:[#allocation2 + $0x68] sm:$0xff]
    %v1262 = vld [vmem:[#allocation2 + $0x70] sm:$0xff]
    %v1263 = vld [vmem:[#allocation9] sm:$0xff]
    %v1264 = vld [vmem:[#allocation9 + $0x8] sm:$0xff]
    %v1265 = vld [vmem:[#allocation9 + $0x10] sm:$0xff]
    %v1266 = vld [vmem:[#allocation9 + $0x18] sm:$0xff]
    %v1267 = vld [vmem:[#allocation9 + $0x20] sm:$0xff]
    %v1268 = vld [vmem:[#allocation9 + $0x28] sm:$0xff]
    %v1269 = vld [vmem:[#allocation9 + $0x30] sm:$0xff]
    %v1270 = vld [vmem:[#allocation9 + $0x38] sm:$0xff]
    %v1271 = vld [vmem:[#allocation9 + $0x40] sm:$0xff]
    %v1272 = vld [vmem:[#allocation9 + $0x48] sm:$0xff]
    %v1273 = vld [vmem:[#allocation9 + $0x50] sm:$0xff]
    %v1274 = vld [vmem:[#allocation9 + $0x58] sm:$0xff]
    %v1275 = vld [vmem:[#allocation9 + $0x60] sm:$0xff]
    %v1276 = vld [vmem:[#allocation9 + $0x68] sm:$0xff]
    %v1277 = vld [vmem:[#allocation9 + $0x70] sm:$0xff]
    %v1278 = vld [vmem:[#allocation9 + $0x78] sm:$0xff]
    %v1279 = vld [vmem:[#allocation9 + $0x80] sm:$0xff]
    %v1280 = vld [vmem:[#allocation9 + $0x88] sm:$0xff]
    %v1281 = vld [vmem:[#allocation9 + $0x90] sm:$0xff]
    %v1282 = vld [vmem:[#allocation9 + $0x98] sm:$0xff]
    %v1283 = vld [vmem:[#allocation9 + $0xa0] sm:$0xff]
    %v1284 = vld [vmem:[#allocation9 + $0xa8] sm:$0xff]
    %v1285 = vld [vmem:[#allocation9 + $0xb0] sm:$0xff]
    %v1286 = vld [vmem:[#allocation9 + $0xb8] sm:$0xff]
    %v1287 = vld [vmem:[#allocation9 + $0xc0] sm:$0xff]
    %v1288 = vld [vmem:[#allocation9 + $0xc8] sm:$0xff]
    %v1289 = vld [vmem:[#allocation9 + $0xd0] sm:$0xff]
    %v1290 = vld [vmem:[#allocation9 + $0xd8] sm:$0xff]
    %v1291 = vld [vmem:[#allocation9 + $0xe0] sm:$0xff]
    %v1292 = vld [vmem:[#allocation9 + $0xe8] sm:$0xff]
    %v1293 = vld [vmem:[#allocation9 + $0xf0] sm:$0xff]
    %v1294 = vld [vmem:[#allocation9 + $0xf8] sm:$0xff]
    %v1295 = vld [vmem:[#allocation9 + $0x100] sm:$0xff]
    %v1296 = vld [vmem:[#allocation9 + $0x108] sm:$0xff]
    %v1297 = vld [vmem:[#allocation9 + $0x110] sm:$0xff]
    %v1298 = vld [vmem:[#allocation9 + $0x118] sm:$0xff]
    %v1299 = vld [vmem:[#allocation9 + $0x120] sm:$0xff]
    %v1300 = vld [vmem:[#allocation9 + $0x128] sm:$0xff]
    %v1301 = vld [vmem:[#allocation9 + $0x130] sm:$0xff]
    %v1302 = vld [vmem:[#allocation9 + $0x138] sm:$0xff]
    %v1303 = vld [vmem:[#allocation9 + $0x140] sm:$0xff]
    %v1304 = vld [vmem:[#allocation9 + $0x148] sm:$0xff]
    %v1305 = vld [vmem:[#allocation9 + $0x150] sm:$0xff]
    %v1306 = vld [vmem:[#allocation9 + $0x158] sm:$0xff]
    %v1307 = vld [vmem:[#allocation9 + $0x160] sm:$0xff]
    %v1308 = vld [vmem:[#allocation9 + $0x168] sm:$0xff]
    %v1309 = vld [vmem:[#allocation9 + $0x170] sm:$0xff]
    %v1310 = vld [vmem:[#allocation9 + $0x178] sm:$0xff]
    %1311 = vmatprep.subr.mxu0 %v1264
    %1312 = vmatpush1.msra.mxu0 %v1263
    %1313 = vmatprep.subr.mxu0 %v1267
    %1314 = vmatpush1.msra.mxu0 %v1266
    %1315 = vmatprep.subr.mxu0 %v1270
    %1316 = vmatpush1.msra.mxu0 %v1269
    %1317 = vmatprep.subr.mxu0 %v1273
    %1318 = vmatpush1.msra.mxu0 %v1272
    %1319 = vmatprep.subr.mxu0 %v1276
    %1320 = vmatpush1.msra.mxu0 %v1275
    %1321 = vmatprep.subr.mxu0 %v1279
    %1322 = vmatpush1.msra.mxu0 %v1278
    %1323 = vmatprep.subr.mxu0 %v1282
    %1324 = vmatpush1.msra.mxu0 %v1281
    %1325 = vmatprep.subr.mxu0 %v1285
    %1326 = vmatpush1.msra.mxu0 %v1284
    %1327 = vmatprep.subr.mxu0 %v1288
    %1328 = vmatpush1.msra.mxu0 %v1287
    %1329 = vmatprep.subr.mxu0 %v1291
    %1330 = vmatpush1.msra.mxu0 %v1290
    %1331 = vmatprep.subr.mxu0 %v1294
    %1332 = vmatpush1.msra.mxu0 %v1293
    %1333 = vmatprep.subr.mxu0 %v1297
    %1334 = vmatpush1.msra.mxu0 %v1296
    %1335 = vmatprep.subr.mxu0 %v1300
    %1336 = vmatpush1.msra.mxu0 %v1299
    %1337 = vmatprep.subr.mxu0 %v1303
    %1338 = vmatpush1.msra.mxu0 %v1302
    %1339 = vmatprep.subr.mxu0 %v1306
    %1340 = vmatpush1.msra.mxu0 %v1305
    %1341 = vmatprep.subr.mxu0 %v1309
    %1342 = vmatpush1.msra.mxu0 %v1308
    %1343 = vmatprep.subr.mxu0 0.0
    %1344 = vmatpush1.msra.mxu0 0.0
    %1345 = vmatprep.subr.mxu0 0.0
    %1346 = vmatpush1.msra.mxu0 0.0
    %1347 = vmatprep.subr.mxu0 0.0
    %1348 = vmatpush1.msra.mxu0 0.0
    %1349 = vmatprep.subr.mxu0 0.0
    %1350 = vmatpush1.msra.mxu0 0.0
    %1351 = vmatprep.subr.mxu0 0.0
    %1352 = vmatpush1.msra.mxu0 0.0
    %1353 = vmatprep.subr.mxu0 0.0
    %1354 = vmatpush1.msra.mxu0 0.0
    %1355 = vmatprep.subr.mxu0 0.0
    %1356 = vmatpush1.msra.mxu0 0.0
    %1357 = vmatprep.subr.mxu0 0.0
    %1358 = vmatpush1.msra.mxu0 0.0
    %1359 = vmatprep.subr.mxu0 0.0
    %1360 = vmatpush1.msra.mxu0 0.0
    %1361 = vmatprep.subr.mxu0 0.0
    %1362 = vmatpush1.msra.mxu0 0.0
    %1363 = vmatprep.subr.mxu0 0.0
    %1364 = vmatpush1.msra.mxu0 0.0
    %1365 = vmatprep.subr.mxu0 0.0
    %1366 = vmatpush1.msra.mxu0 0.0
    %1367 = vmatprep.subr.mxu0 0.0
    %1368 = vmatpush1.msra.mxu0 0.0
    %1369 = vmatprep.subr.mxu0 0.0
    %1370 = vmatpush1.msra.mxu0 0.0
    %1371 = vmatprep.subr.mxu0 0.0
    %1372 = vmatpush1.msra.mxu0 0.0
    %1373 = vmatprep.subr.mxu0 0.0
    %1374 = vmatpush1.msra.mxu0 0.0
    %1375 = vmatprep.mubr.f32.mxu0 0.0
    %1376 = vmatmul.mubr.f32.gmra.mrb[0].mxu0 %v1258
    %v1377 = vpop.f32.mrb[0].mxu0
    %v1378 = vadd.f32 0.0, %v1377
    %v1379 = vpop.f32.mrb[0].mxu0
    %v1380 = vadd.f32 0.0, %v1379
    %1381 = vdwg.mxu0
    %1382 = vmatprep.subr.mxu0 0.0
    %1383 = vmatpush1.msra.mxu0 %v1265
    %1384 = vmatprep.subr.mxu0 0.0
    %1385 = vmatpush1.msra.mxu0 %v1268
    %1386 = vmatprep.subr.mxu0 0.0
    %1387 = vmatpush1.msra.mxu0 %v1271
    %1388 = vmatprep.subr.mxu0 0.0
    %1389 = vmatpush1.msra.mxu0 %v1274
    %1390 = vmatprep.subr.mxu0 0.0
    %1391 = vmatpush1.msra.mxu0 %v1277
    %1392 = vmatprep.subr.mxu0 0.0
    %1393 = vmatpush1.msra.mxu0 %v1280
    %1394 = vmatprep.subr.mxu0 0.0
    %1395 = vmatpush1.msra.mxu0 %v1283
    %1396 = vmatprep.subr.mxu0 0.0
    %1397 = vmatpush1.msra.mxu0 %v1286
    %1398 = vmatprep.subr.mxu0 0.0
    %1399 = vmatpush1.msra.mxu0 %v1289
    %1400 = vmatprep.subr.mxu0 0.0
    %1401 = vmatpush1.msra.mxu0 %v1292
    %1402 = vmatprep.subr.mxu0 0.0
    %1403 = vmatpush1.msra.mxu0 %v1295
    %1404 = vmatprep.subr.mxu0 0.0
    %1405 = vmatpush1.msra.mxu0 %v1298
    %1406 = vmatprep.subr.mxu0 0.0
    %1407 = vmatpush1.msra.mxu0 %v1301
    %1408 = vmatprep.subr.mxu0 0.0
    %1409 = vmatpush1.msra.mxu0 %v1304
    %1410 = vmatprep.subr.mxu0 0.0
    %1411 = vmatpush1.msra.mxu0 %v1307
    %1412 = vmatprep.subr.mxu0 0.0
    %1413 = vmatpush1.msra.mxu0 %v1310
    %1414 = vmatprep.subr.mxu0 0.0
    %1415 = vmatpush1.msra.mxu0 0.0
    %1416 = vmatprep.subr.mxu0 0.0
    %1417 = vmatpush1.msra.mxu0 0.0
    %1418 = vmatprep.subr.mxu0 0.0
    %1419 = vmatpush1.msra.mxu0 0.0
    %1420 = vmatprep.subr.mxu0 0.0
    %1421 = vmatpush1.msra.mxu0 0.0
    %1422 = vmatprep.subr.mxu0 0.0
    %1423 = vmatpush1.msra.mxu0 0.0
    %1424 = vmatprep.subr.mxu0 0.0
    %1425 = vmatpush1.msra.mxu0 0.0
    %1426 = vmatprep.subr.mxu0 0.0
    %1427 = vmatpush1.msra.mxu0 0.0
    %1428 = vmatprep.subr.mxu0 0.0
    %1429 = vmatpush1.msra.mxu0 0.0
    %1430 = vmatprep.subr.mxu0 0.0
    %1431 = vmatpush1.msra.mxu0 0.0
    %1432 = vmatprep.subr.mxu0 0.0
    %1433 = vmatpush1.msra.mxu0 0.0
    %1434 = vmatprep.subr.mxu0 0.0
    %1435 = vmatpush1.msra.mxu0 0.0
    %1436 = vmatprep.subr.mxu0 0.0
    %1437 = vmatpush1.msra.mxu0 0.0
    %1438 = vmatprep.subr.mxu0 0.0
    %1439 = vmatpush1.msra.mxu0 0.0
    %1440 = vmatprep.subr.mxu0 0.0
    %1441 = vmatpush1.msra.mxu0 0.0
    %1442 = vmatprep.subr.mxu0 0.0
    %1443 = vmatpush1.msra.mxu0 0.0
    %1444 = vmatprep.subr.mxu0 0.0
    %1445 = vmatpush1.msra.mxu0 0.0
    %1446 = vmatprep.mubr.f32.mxu0 0.0
    %1447 = vmatmul.mubr.f32.gmra.mrb[0].mxu0 %v1258
    %v1448 = vpop.f32.mrb[0].mxu0
    %v1449 = vadd.f32 0.0, %v1448
    %v1450 = vpop.f32.mrb[0].mxu0
    %1451 = vdwg.mxu0
    %v1452 = vadd.f32 %v1260, %v1378
    %v1453 = vxor.u32 %v1452, 2147483648
    %v1454 = vmul.f32 %v1453, 1.442695
    %v1455 = vpow.pop %v1454
    %v1456 = vadd.f32 %v1455, 1.0
    %v1457 = vrcp.pop %v1456
    %v1458 = vmul.f32 1.0, %v1457
    %v1459 = vadd.f32 %v1261, %v1380
    %v1460 = vxor.u32 %v1459, 2147483648
    %v1461 = vmul.f32 %v1460, 1.442695
    %v1462 = vpow.pop %v1461
    %v1463 = vadd.f32 %v1462, 1.0
    %v1464 = vrcp.pop %v1463
    %v1465 = vmul.f32 1.0, %v1464
    %v1466 = vadd.f32 %v1449, %v604
    %v1467 = vmul.f32 %v1458, %v1466
    %v1468 = vadd.f32 %v1262, %v1467
    %v1469 = vtanh.pop %v1468
    %v1470 = vsub.f32 1.0, %v1465
    %v1471 = vmul.f32 %v1470, %v1469
    %v1472 = vmul.f32 %v1465, %v1258
    %v1473 = vadd.f32 %v1471, %v1472
    %1474 = vst [vmem:[#allocation11 + $0x20] sm:$0xff] %v1473
    %v1475 = vld [vmem:[#allocation2 + $0x78] sm:$0xff]
    %v1476 = vld [vmem:[#allocation2 + $0x80] sm:$0xff]
    %v1477 = vld [vmem:[#allocation2 + $0x88] sm:$0xff]
    %v1478 = vld [vmem:[#allocation9] sm:$0xff]
    %v1479 = vld [vmem:[#allocation9 + $0x8] sm:$0xff]
    %v1480 = vld [vmem:[#allocation9 + $0x10] sm:$0xff]
    %v1481 = vld [vmem:[#allocation9 + $0x18] sm:$0xff]
    %v1482 = vld [vmem:[#allocation9 + $0x20] sm:$0xff]
    %v1483 = vld [vmem:[#allocation9 + $0x28] sm:$0xff]
    %v1484 = vld [vmem:[#allocation9 + $0x30] sm:$0xff]
    %v1485 = vld [vmem:[#allocation9 + $0x38] sm:$0xff]
    %v1486 = vld [vmem:[#allocation9 + $0x40] sm:$0xff]
    %v1487 = vld [vmem:[#allocation9 + $0x48] sm:$0xff]
    %v1488 = vld [vmem:[#allocation9 + $0x50] sm:$0xff]
    %v1489 = vld [vmem:[#allocation9 + $0x58] sm:$0xff]
    %v1490 = vld [vmem:[#allocation9 + $0x60] sm:$0xff]
    %v1491 = vld [vmem:[#allocation9 + $0x68] sm:$0xff]
    %v1492 = vld [vmem:[#allocation9 + $0x70] sm:$0xff]
    %v1493 = vld [vmem:[#allocation9 + $0x78] sm:$0xff]
    %v1494 = vld [vmem:[#allocation9 + $0x80] sm:$0xff]
    %v1495 = vld [vmem:[#allocation9 + $0x88] sm:$0xff]
    %v1496 = vld [vmem:[#allocation9 + $0x90] sm:$0xff]
    %v1497 = vld [vmem:[#allocation9 + $0x98] sm:$0xff]
    %v1498 = vld [vmem:[#allocation9 + $0xa0] sm:$0xff]
    %v1499 = vld [vmem:[#allocation9 + $0xa8] sm:$0xff]
    %v1500 = vld [vmem:[#allocation9 + $0xb0] sm:$0xff]
    %v1501 = vld [vmem:[#allocation9 + $0xb8] sm:$0xff]
    %v1502 = vld [vmem:[#allocation9 + $0xc0] sm:$0xff]
    %v1503 = vld [vmem:[#allocation9 + $0xc8] sm:$0xff]
    %v1504 = vld [vmem:[#allocation9 + $0xd0] sm:$0xff]
    %v1505 = vld [vmem:[#allocation9 + $0xd8] sm:$0xff]
    %v1506 = vld [vmem:[#allocation9 + $0xe0] sm:$0xff]
    %v1507 = vld [vmem:[#allocation9 + $0xe8] sm:$0xff]
    %v1508 = vld [vmem:[#allocation9 + $0xf0] sm:$0xff]
    %v1509 = vld [vmem:[#allocation9 + $0xf8] sm:$0xff]
    %v1510 = vld [vmem:[#allocation9 + $0x100] sm:$0xff]
    %v1511 = vld [vmem:[#allocation9 + $0x108] sm:$0xff]
    %v1512 = vld [vmem:[#allocation9 + $0x110] sm:$0xff]
    %v1513 = vld [vmem:[#allocation9 + $0x118] sm:$0xff]
    %v1514 = vld [vmem:[#allocation9 + $0x120] sm:$0xff]
    %v1515 = vld [vmem:[#allocation9 + $0x128] sm:$0xff]
    %v1516 = vld [vmem:[#allocation9 + $0x130] sm:$0xff]
    %v1517 = vld [vmem:[#allocation9 + $0x138] sm:$0xff]
    %v1518 = vld [vmem:[#allocation9 + $0x140] sm:$0xff]
    %v1519 = vld [vmem:[#allocation9 + $0x148] sm:$0xff]
    %v1520 = vld [vmem:[#allocation9 + $0x150] sm:$0xff]
    %v1521 = vld [vmem:[#allocation9 + $0x158] sm:$0xff]
    %v1522 = vld [vmem:[#allocation9 + $0x160] sm:$0xff]
    %v1523 = vld [vmem:[#allocation9 + $0x168] sm:$0xff]
    %v1524 = vld [vmem:[#allocation9 + $0x170] sm:$0xff]
    %v1525 = vld [vmem:[#allocation9 + $0x178] sm:$0xff]
    %1526 = vmatprep.subr.mxu0 %v1479
    %1527 = vmatpush1.msra.mxu0 %v1478
    %1528 = vmatprep.subr.mxu0 %v1482
    %1529 = vmatpush1.msra.mxu0 %v1481
    %1530 = vmatprep.subr.mxu0 %v1485
    %1531 = vmatpush1.msra.mxu0 %v1484
    %1532 = vmatprep.subr.mxu0 %v1488
    %1533 = vmatpush1.msra.mxu0 %v1487
    %1534 = vmatprep.subr.mxu0 %v1491
    %1535 = vmatpush1.msra.mxu0 %v1490
    %1536 = vmatprep.subr.mxu0 %v1494
    %1537 = vmatpush1.msra.mxu0 %v1493
    %1538 = vmatprep.subr.mxu0 %v1497
    %1539 = vmatpush1.msra.mxu0 %v1496
    %1540 = vmatprep.subr.mxu0 %v1500
    %1541 = vmatpush1.msra.mxu0 %v1499
    %1542 = vmatprep.subr.mxu0 %v1503
    %1543 = vmatpush1.msra.mxu0 %v1502
    %1544 = vmatprep.subr.mxu0 %v1506
    %1545 = vmatpush1.msra.mxu0 %v1505
    %1546 = vmatprep.subr.mxu0 %v1509
    %1547 = vmatpush1.msra.mxu0 %v1508
    %1548 = vmatprep.subr.mxu0 %v1512
    %1549 = vmatpush1.msra.mxu0 %v1511
    %1550 = vmatprep.subr.mxu0 %v1515
    %1551 = vmatpush1.msra.mxu0 %v1514
    %1552 = vmatprep.subr.mxu0 %v1518
    %1553 = vmatpush1.msra.mxu0 %v1517
    %1554 = vmatprep.subr.mxu0 %v1521
    %1555 = vmatpush1.msra.mxu0 %v1520
    %1556 = vmatprep.subr.mxu0 %v1524
    %1557 = vmatpush1.msra.mxu0 %v1523
    %1558 = vmatprep.subr.mxu0 0.0
    %1559 = vmatpush1.msra.mxu0 0.0
    %1560 = vmatprep.subr.mxu0 0.0
    %1561 = vmatpush1.msra.mxu0 0.0
    %1562 = vmatprep.subr.mxu0 0.0
    %1563 = vmatpush1.msra.mxu0 0.0
    %1564 = vmatprep.subr.mxu0 0.0
    %1565 = vmatpush1.msra.mxu0 0.0
    %1566 = vmatprep.subr.mxu0 0.0
    %1567 = vmatpush1.msra.mxu0 0.0
    %1568 = vmatprep.subr.mxu0 0.0
    %1569 = vmatpush1.msra.mxu0 0.0
    %1570 = vmatprep.subr.mxu0 0.0
    %1571 = vmatpush1.msra.mxu0 0.0
    %1572 = vmatprep.subr.mxu0 0.0
    %1573 = vmatpush1.msra.mxu0 0.0
    %1574 = vmatprep.subr.mxu0 0.0
    %1575 = vmatpush1.msra.mxu0 0.0
    %1576 = vmatprep.subr.mxu0 0.0
    %1577 = vmatpush1.msra.mxu0 0.0
    %1578 = vmatprep.subr.mxu0 0.0
    %1579 = vmatpush1.msra.mxu0 0.0
    %1580 = vmatprep.subr.mxu0 0.0
    %1581 = vmatpush1.msra.mxu0 0.0
    %1582 = vmatprep.subr.mxu0 0.0
    %1583 = vmatpush1.msra.mxu0 0.0
    %1584 = vmatprep.subr.mxu0 0.0
    %1585 = vmatpush1.msra.mxu0 0.0
    %1586 = vmatprep.subr.mxu0 0.0
    %1587 = vmatpush1.msra.mxu0 0.0
    %1588 = vmatprep.subr.mxu0 0.0
    %1589 = vmatpush1.msra.mxu0 0.0
    %1590 = vmatprep.mubr.f32.mxu0 0.0
    %1591 = vmatmul.mubr.f32.gmra.mrb[0].mxu0 %v1473
    %v1592 = vpop.f32.mrb[0].mxu0
    %v1593 = vadd.f32 0.0, %v1592
    %v1594 = vpop.f32.mrb[0].mxu0
    %v1595 = vadd.f32 0.0, %v1594
    %1596 = vdwg.mxu0
    %1597 = vmatprep.subr.mxu0 0.0
    %1598 = vmatpush1.msra.mxu0 %v1480
    %1599 = vmatprep.subr.mxu0 0.0
    %1600 = vmatpush1.msra.mxu0 %v1483
    %1601 = vmatprep.subr.mxu0 0.0
    %1602 = vmatpush1.msra.mxu0 %v1486
    %1603 = vmatprep.subr.mxu0 0.0
    %1604 = vmatpush1.msra.mxu0 %v1489
    %1605 = vmatprep.subr.mxu0 0.0
    %1606 = vmatpush1.msra.mxu0 %v1492
    %1607 = vmatprep.subr.mxu0 0.0
    %1608 = vmatpush1.msra.mxu0 %v1495
    %1609 = vmatprep.subr.mxu0 0.0
    %1610 = vmatpush1.msra.mxu0 %v1498
    %1611 = vmatprep.subr.mxu0 0.0
    %1612 = vmatpush1.msra.mxu0 %v1501
    %1613 = vmatprep.subr.mxu0 0.0
    %1614 = vmatpush1.msra.mxu0 %v1504
    %1615 = vmatprep.subr.mxu0 0.0
    %1616 = vmatpush1.msra.mxu0 %v1507
    %1617 = vmatprep.subr.mxu0 0.0
    %1618 = vmatpush1.msra.mxu0 %v1510
    %1619 = vmatprep.subr.mxu0 0.0
    %1620 = vmatpush1.msra.mxu0 %v1513
    %1621 = vmatprep.subr.mxu0 0.0
    %1622 = vmatpush1.msra.mxu0 %v1516
    %1623 = vmatprep.subr.mxu0 0.0
    %1624 = vmatpush1.msra.mxu0 %v1519
    %1625 = vmatprep.subr.mxu0 0.0
    %1626 = vmatpush1.msra.mxu0 %v1522
    %1627 = vmatprep.subr.mxu0 0.0
    %1628 = vmatpush1.msra.mxu0 %v1525
    %1629 = vmatprep.subr.mxu0 0.0
    %1630 = vmatpush1.msra.mxu0 0.0
    %1631 = vmatprep.subr.mxu0 0.0
    %1632 = vmatpush1.msra.mxu0 0.0
    %1633 = vmatprep.subr.mxu0 0.0
    %1634 = vmatpush1.msra.mxu0 0.0
    %1635 = vmatprep.subr.mxu0 0.0
    %1636 = vmatpush1.msra.mxu0 0.0
    %1637 = vmatprep.subr.mxu0 0.0
    %1638 = vmatpush1.msra.mxu0 0.0
    %1639 = vmatprep.subr.mxu0 0.0
    %1640 = vmatpush1.msra.mxu0 0.0
    %1641 = vmatprep.subr.mxu0 0.0
    %1642 = vmatpush1.msra.mxu0 0.0
    %1643 = vmatprep.subr.mxu0 0.0
    %1644 = vmatpush1.msra.mxu0 0.0
    %1645 = vmatprep.subr.mxu0 0.0
    %1646 = vmatpush1.msra.mxu0 0.0
    %1647 = vmatprep.subr.mxu0 0.0
    %1648 = vmatpush1.msra.mxu0 0.0
    %1649 = vmatprep.subr.mxu0 0.0
    %1650 = vmatpush1.msra.mxu0 0.0
    %1651 = vmatprep.subr.mxu0 0.0
    %1652 = vmatpush1.msra.mxu0 0.0
    %1653 = vmatprep.subr.mxu0 0.0
    %1654 = vmatpush1.msra.mxu0 0.0
    %1655 = vmatprep.subr.mxu0 0.0
    %1656 = vmatpush1.msra.mxu0 0.0
    %1657 = vmatprep.subr.mxu0 0.0
    %1658 = vmatpush1.msra.mxu0 0.0
    %1659 = vmatprep.subr.mxu0 0.0
    %1660 = vmatpush1.msra.mxu0 0.0
    %1661 = vmatprep.mubr.f32.mxu0 0.0
    %1662 = vmatmul.mubr.f32.gmra.mrb[0].mxu0 %v1473
    %v1663 = vpop.f32.mrb[0].mxu0
    %v1664 = vadd.f32 0.0, %v1663
    %v1665 = vpop.f32.mrb[0].mxu0
    %1666 = vdwg.mxu0
    %v1667 = vadd.f32 %v1475, %v1593
    %v1668 = vxor.u32 %v1667, 2147483648
    %v1669 = vmul.f32 %v1668, 1.442695
    %v1670 = vpow.pop %v1669
    %v1671 = vadd.f32 %v1670, 1.0
    %v1672 = vrcp.pop %v1671
    %v1673 = vmul.f32 1.0, %v1672
    %v1674 = vadd.f32 %v1476, %v1595
    %v1675 = vxor.u32 %v1674, 2147483648
    %v1676 = vmul.f32 %v1675, 1.442695
    %v1677 = vpow.pop %v1676
    %v1678 = vadd.f32 %v1677, 1.0
    %v1679 = vrcp.pop %v1678
    %v1680 = vmul.f32 1.0, %v1679
    %v1681 = vadd.f32 %v1664, %v604
    %v1682 = vmul.f32 %v1673, %v1681
    %v1683 = vadd.f32 %v1477, %v1682
    %v1684 = vtanh.pop %v1683
    %v1685 = vsub.f32 1.0, %v1680
    %v1686 = vmul.f32 %v1685, %v1684
    %v1687 = vmul.f32 %v1680, %v1473
    %v1688 = vadd.f32 %v1686, %v1687
    %1689 = vst [vmem:[#allocation11 + $0x28] sm:$0xff] %v1688
    %v1690 = vld [vmem:[#allocation2 + $0x90] sm:$0xff]
    %v1691 = vld [vmem:[#allocation2 + $0x98] sm:$0xff]
    %v1692 = vld [vmem:[#allocation2 + $0xa0] sm:$0xff]
    %v1693 = vld [vmem:[#allocation9] sm:$0xff]
    %v1694 = vld [vmem:[#allocation9 + $0x8] sm:$0xff]
    %v1695 = vld [vmem:[#allocation9 + $0x10] sm:$0xff]
    %v1696 = vld [vmem:[#allocation9 + $0x18] sm:$0xff]
    %v1697 = vld [vmem:[#allocation9 + $0x20] sm:$0xff]
    %v1698 = vld [vmem:[#allocation9 + $0x28] sm:$0xff]
    %v1699 = vld [vmem:[#allocation9 + $0x30] sm:$0xff]
    %v1700 = vld [vmem:[#allocation9 + $0x38] sm:$0xff]
    %v1701 = vld [vmem:[#allocation9 + $0x40] sm:$0xff]
    %v1702 = vld [vmem:[#allocation9 + $0x48] sm:$0xff]
    %v1703 = vld [vmem:[#allocation9 + $0x50] sm:$0xff]
    %v1704 = vld [vmem:[#allocation9 + $0x58] sm:$0xff]
    %v1705 = vld [vmem:[#allocation9 + $0x60] sm:$0xff]
    %v1706 = vld [vmem:[#allocation9 + $0x68] sm:$0xff]
    %v1707 = vld [vmem:[#allocation9 + $0x70] sm:$0xff]
    %v1708 = vld [vmem:[#allocation9 + $0x78] sm:$0xff]
    %v1709 = vld [vmem:[#allocation9 + $0x80] sm:$0xff]
    %v1710 = vld [vmem:[#allocation9 + $0x88] sm:$0xff]
    %v1711 = vld [vmem:[#allocation9 + $0x90] sm:$0xff]
    %v1712 = vld [vmem:[#allocation9 + $0x98] sm:$0xff]
    %v1713 = vld [vmem:[#allocation9 + $0xa0] sm:$0xff]
    %v1714 = vld [vmem:[#allocation9 + $0xa8] sm:$0xff]
    %v1715 = vld [vmem:[#allocation9 + $0xb0] sm:$0xff]
    %v1716 = vld [vmem:[#allocation9 + $0xb8] sm:$0xff]
    %v1717 = vld [vmem:[#allocation9 + $0xc0] sm:$0xff]
    %v1718 = vld [vmem:[#allocation9 + $0xc8] sm:$0xff]
    %v1719 = vld [vmem:[#allocation9 + $0xd0] sm:$0xff]
    %v1720 = vld [vmem:[#allocation9 + $0xd8] sm:$0xff]
    %v1721 = vld [vmem:[#allocation9 + $0xe0] sm:$0xff]
    %v1722 = vld [vmem:[#allocation9 + $0xe8] sm:$0xff]
    %v1723 = vld [vmem:[#allocation9 + $0xf0] sm:$0xff]
    %v1724 = vld [vmem:[#allocation9 + $0xf8] sm:$0xff]
    %v1725 = vld [vmem:[#allocation9 + $0x100] sm:$0xff]
    %v1726 = vld [vmem:[#allocation9 + $0x108] sm:$0xff]
    %v1727 = vld [vmem:[#allocation9 + $0x110] sm:$0xff]
    %v1728 = vld [vmem:[#allocation9 + $0x118] sm:$0xff]
    %v1729 = vld [vmem:[#allocation9 + $0x120] sm:$0xff]
    %v1730 = vld [vmem:[#allocation9 + $0x128] sm:$0xff]
    %v1731 = vld [vmem:[#allocation9 + $0x130] sm:$0xff]
    %v1732 = vld [vmem:[#allocation9 + $0x138] sm:$0xff]
    %v1733 = vld [vmem:[#allocation9 + $0x140] sm:$0xff]
    %v1734 = vld [vmem:[#allocation9 + $0x148] sm:$0xff]
    %v1735 = vld [vmem:[#allocation9 + $0x150] sm:$0xff]
    %v1736 = vld [vmem:[#allocation9 + $0x158] sm:$0xff]
    %v1737 = vld [vmem:[#allocation9 + $0x160] sm:$0xff]
    %v1738 = vld [vmem:[#allocation9 + $0x168] sm:$0xff]
    %v1739 = vld [vmem:[#allocation9 + $0x170] sm:$0xff]
    %v1740 = vld [vmem:[#allocation9 + $0x178] sm:$0xff]
    %1741 = vmatprep.subr.mxu0 %v1694
    %1742 = vmatpush1.msra.mxu0 %v1693
    %1743 = vmatprep.subr.mxu0 %v1697
    %1744 = vmatpush1.msra.mxu0 %v1696
    %1745 = vmatprep.subr.mxu0 %v1700
    %1746 = vmatpush1.msra.mxu0 %v1699
    %1747 = vmatprep.subr.mxu0 %v1703
    %1748 = vmatpush1.msra.mxu0 %v1702
    %1749 = vmatprep.subr.mxu0 %v1706
    %1750 = vmatpush1.msra.mxu0 %v1705
    %1751 = vmatprep.subr.mxu0 %v1709
    %1752 = vmatpush1.msra.mxu0 %v1708
    %1753 = vmatprep.subr.mxu0 %v1712
    %1754 = vmatpush1.msra.mxu0 %v1711
    %1755 = vmatprep.subr.mxu0 %v1715
    %1756 = vmatpush1.msra.mxu0 %v1714
    %1757 = vmatprep.subr.mxu0 %v1718
    %1758 = vmatpush1.msra.mxu0 %v1717
    %1759 = vmatprep.subr.mxu0 %v1721
    %1760 = vmatpush1.msra.mxu0 %v1720
    %1761 = vmatprep.subr.mxu0 %v1724
    %1762 = vmatpush1.msra.mxu0 %v1723
    %1763 = vmatprep.subr.mxu0 %v1727
    %1764 = vmatpush1.msra.mxu0 %v1726
    %1765 = vmatprep.subr.mxu0 %v1730
    %1766 = vmatpush1.msra.mxu0 %v1729
    %1767 = vmatprep.subr.mxu0 %v1733
    %1768 = vmatpush1.msra.mxu0 %v1732
    %1769 = vmatprep.subr.mxu0 %v1736
    %1770 = vmatpush1.msra.mxu0 %v1735
    %1771 = vmatprep.subr.mxu0 %v1739
    %1772 = vmatpush1.msra.mxu0 %v1738
    %1773 = vmatprep.subr.mxu0 0.0
    %1774 = vmatpush1.msra.mxu0 0.0
    %1775 = vmatprep.subr.mxu0 0.0
    %1776 = vmatpush1.msra.mxu0 0.0
    %1777 = vmatprep.subr.mxu0 0.0
    %1778 = vmatpush1.msra.mxu0 0.0
    %1779 = vmatprep.subr.mxu0 0.0
    %1780 = vmatpush1.msra.mxu0 0.0
    %1781 = vmatprep.subr.mxu0 0.0
    %1782 = vmatpush1.msra.mxu0 0.0
    %1783 = vmatprep.subr.mxu0 0.0
    %1784 = vmatpush1.msra.mxu0 0.0
    %1785 = vmatprep.subr.mxu0 0.0
    %1786 = vmatpush1.msra.mxu0 0.0
    %1787 = vmatprep.subr.mxu0 0.0
    %1788 = vmatpush1.msra.mxu0 0.0
    %1789 = vmatprep.subr.mxu0 0.0
    %1790 = vmatpush1.msra.mxu0 0.0
    %1791 = vmatprep.subr.mxu0 0.0
    %1792 = vmatpush1.msra.mxu0 0.0
    %1793 = vmatprep.subr.mxu0 0.0
    %1794 = vmatpush1.msra.mxu0 0.0
    %1795 = vmatprep.subr.mxu0 0.0
    %1796 = vmatpush1.msra.mxu0 0.0
    %1797 = vmatprep.subr.mxu0 0.0
    %1798 = vmatpush1.msra.mxu0 0.0
    %1799 = vmatprep.subr.mxu0 0.0
    %1800 = vmatpush1.msra.mxu0 0.0
    %1801 = vmatprep.subr.mxu0 0.0
    %1802 = vmatpush1.msra.mxu0 0.0
    %1803 = vmatprep.subr.mxu0 0.0
    %1804 = vmatpush1.msra.mxu0 0.0
    %1805 = vmatprep.mubr.f32.mxu0 0.0
    %1806 = vmatmul.mubr.f32.gmra.mrb[0].mxu0 %v1688
    %v1807 = vpop.f32.mrb[0].mxu0
    %v1808 = vadd.f32 0.0, %v1807
    %v1809 = vpop.f32.mrb[0].mxu0
    %v1810 = vadd.f32 0.0, %v1809
    %1811 = vdwg.mxu0
    %1812 = vmatprep.subr.mxu0 0.0
    %1813 = vmatpush1.msra.mxu0 %v1695
    %1814 = vmatprep.subr.mxu0 0.0
    %1815 = vmatpush1.msra.mxu0 %v1698
    %1816 = vmatprep.subr.mxu0 0.0
    %1817 = vmatpush1.msra.mxu0 %v1701
    %1818 = vmatprep.subr.mxu0 0.0
    %1819 = vmatpush1.msra.mxu0 %v1704
    %1820 = vmatprep.subr.mxu0 0.0
    %1821 = vmatpush1.msra.mxu0 %v1707
    %1822 = vmatprep.subr.mxu0 0.0
    %1823 = vmatpush1.msra.mxu0 %v1710
    %1824 = vmatprep.subr.mxu0 0.0
    %1825 = vmatpush1.msra.mxu0 %v1713
    %1826 = vmatprep.subr.mxu0 0.0
    %1827 = vmatpush1.msra.mxu0 %v1716
    %1828 = vmatprep.subr.mxu0 0.0
    %1829 = vmatpush1.msra.mxu0 %v1719
    %1830 = vmatprep.subr.mxu0 0.0
    %1831 = vmatpush1.msra.mxu0 %v1722
    %1832 = vmatprep.subr.mxu0 0.0
    %1833 = vmatpush1.msra.mxu0 %v1725
    %1834 = vmatprep.subr.mxu0 0.0
    %1835 = vmatpush1.msra.mxu0 %v1728
    %1836 = vmatprep.subr.mxu0 0.0
    %1837 = vmatpush1.msra.mxu0 %v1731
    %1838 = vmatprep.subr.mxu0 0.0
    %1839 = vmatpush1.msra.mxu0 %v1734
    %1840 = vmatprep.subr.mxu0 0.0
    %1841 = vmatpush1.msra.mxu0 %v1737
    %1842 = vmatprep.subr.mxu0 0.0
    %1843 = vmatpush1.msra.mxu0 %v1740
    %1844 = vmatprep.subr.mxu0 0.0
    %1845 = vmatpush1.msra.mxu0 0.0
    %1846 = vmatprep.subr.mxu0 0.0
    %1847 = vmatpush1.msra.mxu0 0.0
    %1848 = vmatprep.subr.mxu0 0.0
    %1849 = vmatpush1.msra.mxu0 0.0
    %1850 = vmatprep.subr.mxu0 0.0
    %1851 = vmatpush1.msra.mxu0 0.0
    %1852 = vmatprep.subr.mxu0 0.0
    %1853 = vmatpush1.msra.mxu0 0.0
    %1854 = vmatprep.subr.mxu0 0.0
    %1855 = vmatpush1.msra.mxu0 0.0
    %1856 = vmatprep.subr.mxu0 0.0
    %1857 = vmatpush1.msra.mxu0 0.0
    %1858 = vmatprep.subr.mxu0 0.0
    %1859 = vmatpush1.msra.mxu0 0.0
    %1860 = vmatprep.subr.mxu0 0.0
    %1861 = vmatpush1.msra.mxu0 0.0
    %1862 = vmatprep.subr.mxu0 0.0
    %1863 = vmatpush1.msra.mxu0 0.0
    %1864 = vmatprep.subr.mxu0 0.0
    %1865 = vmatpush1.msra.mxu0 0.0
    %1866 = vmatprep.subr.mxu0 0.0
    %1867 = vmatpush1.msra.mxu0 0.0
    %1868 = vmatprep.subr.mxu0 0.0
    %1869 = vmatpush1.msra.mxu0 0.0
    %1870 = vmatprep.subr.mxu0 0.0
    %1871 = vmatpush1.msra.mxu0 0.0
    %1872 = vmatprep.subr.mxu0 0.0
    %1873 = vmatpush1.msra.mxu0 0.0
    %1874 = vmatprep.subr.mxu0 0.0
    %1875 = vmatpush1.msra.mxu0 0.0
    %1876 = vmatprep.mubr.f32.mxu0 0.0
    %1877 = vmatmul.mubr.f32.gmra.mrb[0].mxu0 %v1688
    %v1878 = vpop.f32.mrb[0].mxu0
    %v1879 = vadd.f32 0.0, %v1878
    %v1880 = vpop.f32.mrb[0].mxu0
    %1881 = vdwg.mxu0
    %v1882 = vadd.f32 %v1690, %v1808
    %v1883 = vxor.u32 %v1882, 2147483648
    %v1884 = vmul.f32 %v1883, 1.442695
    %v1885 = vpow.pop %v1884
    %v1886 = vadd.f32 %v1885, 1.0
    %v1887 = vrcp.pop %v1886
    %v1888 = vmul.f32 1.0, %v1887
    %v1889 = vadd.f32 %v1691, %v1810
    %v1890 = vxor.u32 %v1889, 2147483648
    %v1891 = vmul.f32 %v1890, 1.442695
    %v1892 = vpow.pop %v1891
    %v1893 = vadd.f32 %v1892, 1.0
    %v1894 = vrcp.pop %v1893
    %v1895 = vmul.f32 1.0, %v1894
    %v1896 = vadd.f32 %v1879, %v604
    %v1897 = vmul.f32 %v1888, %v1896
    %v1898 = vadd.f32 %v1692, %v1897
    %v1899 = vtanh.pop %v1898
    %v1900 = vsub.f32 1.0, %v1895
    %v1901 = vmul.f32 %v1900, %v1899
    %v1902 = vmul.f32 %v1895, %v1688
    %v1903 = vadd.f32 %v1901, %v1902
    %1904 = vst [vmem:[#allocation11 + $0x30] sm:$0xff] %v1903
    %v1905 = vld [vmem:[#allocation2 + $0xa8] sm:$0xff]
    %v1906 = vld [vmem:[#allocation2 + $0xb0] sm:$0xff]
    %v1907 = vld [vmem:[#allocation2 + $0xb8] sm:$0xff]
    %v1908 = vld [vmem:[#allocation9] sm:$0xff]
    %v1909 = vld [vmem:[#allocation9 + $0x8] sm:$0xff]
    %v1910 = vld [vmem:[#allocation9 + $0x10] sm:$0xff]
    %v1911 = vld [vmem:[#allocation9 + $0x18] sm:$0xff]
    %v1912 = vld [vmem:[#allocation9 + $0x20] sm:$0xff]
    %v1913 = vld [vmem:[#allocation9 + $0x28] sm:$0xff]
    %v1914 = vld [vmem:[#allocation9 + $0x30] sm:$0xff]
    %v1915 = vld [vmem:[#allocation9 + $0x38] sm:$0xff]
    %v1916 = vld [vmem:[#allocation9 + $0x40] sm:$0xff]
    %v1917 = vld [vmem:[#allocation9 + $0x48] sm:$0xff]
    %v1918 = vld [vmem:[#allocation9 + $0x50] sm:$0xff]
    %v1919 = vld [vmem:[#allocation9 + $0x58] sm:$0xff]
    %v1920 = vld [vmem:[#allocation9 + $0x60] sm:$0xff]
    %v1921 = vld [vmem:[#allocation9 + $0x68] sm:$0xff]
    %v1922 = vld [vmem:[#allocation9 + $0x70] sm:$0xff]
    %v1923 = vld [vmem:[#allocation9 + $0x78] sm:$0xff]
    %v1924 = vld [vmem:[#allocation9 + $0x80] sm:$0xff]
    %v1925 = vld [vmem:[#allocation9 + $0x88] sm:$0xff]
    %v1926 = vld [vmem:[#allocation9 + $0x90] sm:$0xff]
    %v1927 = vld [vmem:[#allocation9 + $0x98] sm:$0xff]
    %v1928 = vld [vmem:[#allocation9 + $0xa0] sm:$0xff]
    %v1929 = vld [vmem:[#allocation9 + $0xa8] sm:$0xff]
    %v1930 = vld [vmem:[#allocation9 + $0xb0] sm:$0xff]
    %v1931 = vld [vmem:[#allocation9 + $0xb8] sm:$0xff]
    %v1932 = vld [vmem:[#allocation9 + $0xc0] sm:$0xff]
    %v1933 = vld [vmem:[#allocation9 + $0xc8] sm:$0xff]
    %v1934 = vld [vmem:[#allocation9 + $0xd0] sm:$0xff]
    %v1935 = vld [vmem:[#allocation9 + $0xd8] sm:$0xff]
    %v1936 = vld [vmem:[#allocation9 + $0xe0] sm:$0xff]
    %v1937 = vld [vmem:[#allocation9 + $0xe8] sm:$0xff]
    %v1938 = vld [vmem:[#allocation9 + $0xf0] sm:$0xff]
    %v1939 = vld [vmem:[#allocation9 + $0xf8] sm:$0xff]
    %v1940 = vld [vmem:[#allocation9 + $0x100] sm:$0xff]
    %v1941 = vld [vmem:[#allocation9 + $0x108] sm:$0xff]
    %v1942 = vld [vmem:[#allocation9 + $0x110] sm:$0xff]
    %v1943 = vld [vmem:[#allocation9 + $0x118] sm:$0xff]
    %v1944 = vld [vmem:[#allocation9 + $0x120] sm:$0xff]
    %v1945 = vld [vmem:[#allocation9 + $0x128] sm:$0xff]
    %v1946 = vld [vmem:[#allocation9 + $0x130] sm:$0xff]
    %v1947 = vld [vmem:[#allocation9 + $0x138] sm:$0xff]
    %v1948 = vld [vmem:[#allocation9 + $0x140] sm:$0xff]
    %v1949 = vld [vmem:[#allocation9 + $0x148] sm:$0xff]
    %v1950 = vld [vmem:[#allocation9 + $0x150] sm:$0xff]
    %v1951 = vld [vmem:[#allocation9 + $0x158] sm:$0xff]
    %v1952 = vld [vmem:[#allocation9 + $0x160] sm:$0xff]
    %v1953 = vld [vmem:[#allocation9 + $0x168] sm:$0xff]
    %v1954 = vld [vmem:[#allocation9 + $0x170] sm:$0xff]
    %v1955 = vld [vmem:[#allocation9 + $0x178] sm:$0xff]
    %1956 = vmatprep.subr.mxu0 %v1909
    %1957 = vmatpush1.msra.mxu0 %v1908
    %1958 = vmatprep.subr.mxu0 %v1912
    %1959 = vmatpush1.msra.mxu0 %v1911
    %1960 = vmatprep.subr.mxu0 %v1915
    %1961 = vmatpush1.msra.mxu0 %v1914
    %1962 = vmatprep.subr.mxu0 %v1918
    %1963 = vmatpush1.msra.mxu0 %v1917
    %1964 = vmatprep.subr.mxu0 %v1921
    %1965 = vmatpush1.msra.mxu0 %v1920
    %1966 = vmatprep.subr.mxu0 %v1924
    %1967 = vmatpush1.msra.mxu0 %v1923
    %1968 = vmatprep.subr.mxu0 %v1927
    %1969 = vmatpush1.msra.mxu0 %v1926
    %1970 = vmatprep.subr.mxu0 %v1930
    %1971 = vmatpush1.msra.mxu0 %v1929
    %1972 = vmatprep.subr.mxu0 %v1933
    %1973 = vmatpush1.msra.mxu0 %v1932
    %1974 = vmatprep.subr.mxu0 %v1936
    %1975 = vmatpush1.msra.mxu0 %v1935
    %1976 = vmatprep.subr.mxu0 %v1939
    %1977 = vmatpush1.msra.mxu0 %v1938
    %1978 = vmatprep.subr.mxu0 %v1942
    %1979 = vmatpush1.msra.mxu0 %v1941
    %1980 = vmatprep.subr.mxu0 %v1945
    %1981 = vmatpush1.msra.mxu0 %v1944
    %1982 = vmatprep.subr.mxu0 %v1948
    %1983 = vmatpush1.msra.mxu0 %v1947
    %1984 = vmatprep.subr.mxu0 %v1951
    %1985 = vmatpush1.msra.mxu0 %v1950
    %1986 = vmatprep.subr.mxu0 %v1954
    %1987 = vmatpush1.msra.mxu0 %v1953
    %1988 = vmatprep.subr.mxu0 0.0
    %1989 = vmatpush1.msra.mxu0 0.0
    %1990 = vmatprep.subr.mxu0 0.0
    %1991 = vmatpush1.msra.mxu0 0.0
    %1992 = vmatprep.subr.mxu0 0.0
    %1993 = vmatpush1.msra.mxu0 0.0
    %1994 = vmatprep.subr.mxu0 0.0
    %1995 = vmatpush1.msra.mxu0 0.0
    %1996 = vmatprep.subr.mxu0 0.0
    %1997 = vmatpush1.msra.mxu0 0.0
    %1998 = vmatprep.subr.mxu0 0.0
    %1999 = vmatpush1.msra.mxu0 0.0
    %2000 = vmatprep.subr.mxu0 0.0
    %2001 = vmatpush1.msra.mxu0 0.0
    %2002 = vmatprep.subr.mxu0 0.0
    %2003 = vmatpush1.msra.mxu0 0.0
    %2004 = vmatprep.subr.mxu0 0.0
    %2005 = vmatpush1.msra.mxu0 0.0
    %2006 = vmatprep.subr.mxu0 0.0
    %2007 = vmatpush1.msra.mxu0 0.0
    %2008 = vmatprep.subr.mxu0 0.0
    %2009 = vmatpush1.msra.mxu0 0.0
    %2010 = vmatprep.subr.mxu0 0.0
    %2011 = vmatpush1.msra.mxu0 0.0
    %2012 = vmatprep.subr.mxu0 0.0
    %2013 = vmatpush1.msra.mxu0 0.0
    %2014 = vmatprep.subr.mxu0 0.0
    %2015 = vmatpush1.msra.mxu0 0.0
    %2016 = vmatprep.subr.mxu0 0.0
    %2017 = vmatpush1.msra.mxu0 0.0
    %2018 = vmatprep.subr.mxu0 0.0
    %2019 = vmatpush1.msra.mxu0 0.0
    %2020 = vmatprep.mubr.f32.mxu0 0.0
    %2021 = vmatmul.mubr.f32.gmra.mrb[0].mxu0 %v1903
    %v2022 = vpop.f32.mrb[0].mxu0
    %v2023 = vadd.f32 0.0, %v2022
    %v2024 = vpop.f32.mrb[0].mxu0
    %v2025 = vadd.f32 0.0, %v2024
    %2026 = vdwg.mxu0
    %2027 = vmatprep.subr.mxu0 0.0
    %2028 = vmatpush1.msra.mxu0 %v1910
    %2029 = vmatprep.subr.mxu0 0.0
    %2030 = vmatpush1.msra.mxu0 %v1913
    %2031 = vmatprep.subr.mxu0 0.0
    %2032 = vmatpush1.msra.mxu0 %v1916
    %2033 = vmatprep.subr.mxu0 0.0
    %2034 = vmatpush1.msra.mxu0 %v1919
    %2035 = vmatprep.subr.mxu0 0.0
    %2036 = vmatpush1.msra.mxu0 %v1922
    %2037 = vmatprep.subr.mxu0 0.0
    %2038 = vmatpush1.msra.mxu0 %v1925
    %2039 = vmatprep.subr.mxu0 0.0
    %2040 = vmatpush1.msra.mxu0 %v1928
    %2041 = vmatprep.subr.mxu0 0.0
    %2042 = vmatpush1.msra.mxu0 %v1931
    %2043 = vmatprep.subr.mxu0 0.0
    %2044 = vmatpush1.msra.mxu0 %v1934
    %2045 = vmatprep.subr.mxu0 0.0
    %2046 = vmatpush1.msra.mxu0 %v1937
    %2047 = vmatprep.subr.mxu0 0.0
    %2048 = vmatpush1.msra.mxu0 %v1940
    %2049 = vmatprep.subr.mxu0 0.0
    %2050 = vmatpush1.msra.mxu0 %v1943
    %2051 = vmatprep.subr.mxu0 0.0
    %2052 = vmatpush1.msra.mxu0 %v1946
    %2053 = vmatprep.subr.mxu0 0.0
    %2054 = vmatpush1.msra.mxu0 %v1949
    %2055 = vmatprep.subr.mxu0 0.0
    %2056 = vmatpush1.msra.mxu0 %v1952
    %2057 = vmatprep.subr.mxu0 0.0
    %2058 = vmatpush1.msra.mxu0 %v1955
    %2059 = vmatprep.subr.mxu0 0.0
    %2060 = vmatpush1.msra.mxu0 0.0
    %2061 = vmatprep.subr.mxu0 0.0
    %2062 = vmatpush1.msra.mxu0 0.0
    %2063 = vmatprep.subr.mxu0 0.0
    %2064 = vmatpush1.msra.mxu0 0.0
    %2065 = vmatprep.subr.mxu0 0.0
    %2066 = vmatpush1.msra.mxu0 0.0
    %2067 = vmatprep.subr.mxu0 0.0
    %2068 = vmatpush1.msra.mxu0 0.0
    %2069 = vmatprep.subr.mxu0 0.0
    %2070 = vmatpush1.msra.mxu0 0.0
    %2071 = vmatprep.subr.mxu0 0.0
    %2072 = vmatpush1.msra.mxu0 0.0
    %2073 = vmatprep.subr.mxu0 0.0
    %2074 = vmatpush1.msra.mxu0 0.0
    %2075 = vmatprep.subr.mxu0 0.0
    %2076 = vmatpush1.msra.mxu0 0.0
    %2077 = vmatprep.subr.mxu0 0.0
    %2078 = vmatpush1.msra.mxu0 0.0
    %2079 = vmatprep.subr.mxu0 0.0
    %2080 = vmatpush1.msra.mxu0 0.0
    %2081 = vmatprep.subr.mxu0 0.0
    %2082 = vmatpush1.msra.mxu0 0.0
    %2083 = vmatprep.subr.mxu0 0.0
    %2084 = vmatpush1.msra.mxu0 0.0
    %2085 = vmatprep.subr.mxu0 0.0
    %2086 = vmatpush1.msra.mxu0 0.0
    %2087 = vmatprep.subr.mxu0 0.0
    %2088 = vmatpush1.msra.mxu0 0.0
    %2089 = vmatprep.subr.mxu0 0.0
    %2090 = vmatpush1.msra.mxu0 0.0
    %2091 = vmatprep.mubr.f32.mxu0 0.0
    %2092 = vmatmul.mubr.f32.gmra.mrb[0].mxu0 %v1903
    %v2093 = vpop.f32.mrb[0].mxu0
    %v2094 = vadd.f32 0.0, %v2093
    %v2095 = vpop.f32.mrb[0].mxu0
    %2096 = vdwg.mxu0
    %v2097 = vadd.f32 %v1905, %v2023
    %v2098 = vxor.u32 %v2097, 2147483648
    %v2099 = vmul.f32 %v2098, 1.442695
    %v2100 = vpow.pop %v2099
    %v2101 = vadd.f32 %v2100, 1.0
    %v2102 = vrcp.pop %v2101
    %v2103 = vmul.f32 1.0, %v2102
    %v2104 = vadd.f32 %v1906, %v2025
    %v2105 = vxor.u32 %v2104, 2147483648
    %v2106 = vmul.f32 %v2105, 1.442695
    %v2107 = vpow.pop %v2106
    %v2108 = vadd.f32 %v2107, 1.0
    %v2109 = vrcp.pop %v2108
    %v2110 = vmul.f32 1.0, %v2109
    %v2111 = vadd.f32 %v2094, %v604
    %v2112 = vmul.f32 %v2103, %v2111
    %v2113 = vadd.f32 %v1907, %v2112
    %v2114 = vtanh.pop %v2113
    %v2115 = vsub.f32 1.0, %v2110
    %v2116 = vmul.f32 %v2115, %v2114
    %v2117 = vmul.f32 %v2110, %v1903
    %v2118 = vadd.f32 %v2116, %v2117
    %2119 = vst [vmem:[#allocation11 + $0x38] sm:$0xff] %v2118
    // Predicated region
    $region42: #{tpu_custom_call.1} parent=1 // pred_check
      _
    $region43: #{tpu_custom_call.1} parent=1 // pred_check_branch
      %2121 = sbr.rel (0) target = $region45
    $region44: #{tpu_custom_call.1} parent=1 // pred_region
      %s2123 = ssub.s32 1024, 1024
      %2124 = vsyncadd [#allocation5], %s2123
      %s2125 = sshll.u32 [#allocation11], 4
      %s2126 = int_to_ptr.vmem [resolvable:$true] %s2125
      %2131 = dma.vmem_to_hbm [thread:$0]  %s2126, 1024, %s6, [#allocation5], 128, 128, 8
    $region45: #{tpu_custom_call.1} parent=1 // pred_fallthru
      _
    // Predicated region
    $region46: #{tpu_custom_call.1} parent=1 // pred_check
      _
    $region47: #{tpu_custom_call.1} parent=1 // pred_check_branch
      %2133 = sbr.rel (0) target = $region49
    $region48: #{tpu_custom_call.1} parent=1 // pred_region
      %2134 = dma.done [#allocation5], 1024
    $region49: #{tpu_custom_call.1} parent=1 // pred_fallthru
      _
    %2135 = vsyncpa [#allocation4], 1
    %2136 = vsyncpa [#allocation7], 1
    %2137 = vsyncpa [#allocation10], 1
    %2138 = vsyncpa [#allocation5], 1

</llo_original>
